<compile_context>
chip_gen: v5e
topology: v5e:2x2
jax: 0.10.0
libtpu: 0.0.40
codegen_flags: <defaults>
</compile_context>

<pallas_src>
import math
import functools

import jax
import jax.numpy as jnp
from jax import lax
from jax.experimental import pallas as pl
from jax.experimental.pallas import tpu as pltpu


def _layer_norm(y, gamma, beta, eps=1e-5):
    mu = jnp.mean(y, axis=-1, keepdims=True)
    var = jnp.mean((y - mu) ** 2, axis=-1, keepdims=True)
    return (y - mu) * lax.rsqrt(var + eps) * gamma + beta


def _encoder_stack_kernel(x_ref, bias_ref,
                          wqkv_ref, bqkv_ref, wo_ref, bo_ref,
                          g1_ref, be1_ref,
                          w1_ref, b1_ref, w2_ref, b2_ref,
                          g2_ref, be2_ref,
                          o_ref,
                          *, n_heads, d_k, d_v, compute_dtype):
    layer = pl.program_id(0)

    # Seed the resident output block with the input activation at the first layer.
    # The output BlockSpec keeps this block in VMEM across the whole layer axis and
    # only writes it back to HBM once, at the end of the grid.
    @pl.when(layer == 0)
    def _():
        o_ref[...] = x_ref[...].astype(o_ref.dtype)

    x = o_ref[...].astype(jnp.float32)       # (B, S, D) carried activation, f32
    B, S, D = x.shape
    H, dk, dv = n_heads, d_k, d_v
    cd = compute_dtype

    x2d = x.reshape(B * S, D)                # fold batch*seq onto the sublane axis

    # ---- fused Q/K/V projection: single MXU pass ----
    qkv = jnp.dot(x2d.astype(cd), wqkv_ref[0],
                  preferred_element_type=jnp.float32) + bqkv_ref[0]  # (B*S, 2Hdk+Hdv)
    q = qkv[:, :H * dk].reshape(B, S, H * dk)
    k = qkv[:, H * dk:2 * H * dk].reshape(B, S, H * dk)
    v = qkv[:, 2 * H * dk:].reshape(B, S, H * dv)

    scale = 1.0 / math.sqrt(dk)
    mask_bias = bias_ref[...]                # (B, 1, S) additive: 0 keep, -1e9 masked

    # ---- multi-head attention: heads statically unrolled, batched over B ----
    head_outs = []
    for h in range(H):
        qh = q[:, :, h * dk:(h + 1) * dk]    # (B, S, dk)  (cheap lane slice)
        kh = k[:, :, h * dk:(h + 1) * dk]    # (B, S, dk)
        vh = v[:, :, h * dv:(h + 1) * dv]    # (B, S, dv)

        # scores[b, q, k] = sum_d qh[b, q, d] * kh[b, k, d]  (no materialized K^T)
        s = lax.dot_general(qh.astype(cd), kh.astype(cd),
                            (((2,), (2,)), ((0,), (0,))),
                            preferred_element_type=jnp.float32) * scale  # (B, S, S)
        s = s + mask_bias
        s = s - jnp.max(s, axis=-1, keepdims=True)
        p = jnp.exp(s)
        p = p * pl.reciprocal(jnp.sum(p, axis=-1, keepdims=True), approx=True)

        # oh[b, q, d] = sum_k p[b, q, k] * vh[b, k, d]
        oh = lax.dot_general(p.astype(cd), vh.astype(cd),
                             (((2,), (1,)), ((0,), (0,))),
                             preferred_element_type=jnp.float32)         # (B, S, dv)
        head_outs.append(oh)

    # Concatenate heads once and apply the output projection as ONE matmul with
    # contraction depth H*dv (better MXU utilization than H tiny matmuls).
    attn = jnp.concatenate(head_outs, axis=-1).reshape(B * S, H * dv)
    attn_proj = jnp.dot(attn.astype(cd), wo_ref[0],
                        preferred_element_type=jnp.float32) + bo_ref[0]  # (B*S, D)

    # ---- residual + LayerNorm 1 (f32) ----
    y = _layer_norm(x2d + attn_proj, g1_ref[0], be1_ref[0])

    # ---- feed-forward ----
    h1 = jnp.dot(y.astype(cd), w1_ref[0], preferred_element_type=jnp.float32) + b1_ref[0]
    h1 = jnp.maximum(h1, 0.0)
    f = jnp.dot(h1.astype(cd), w2_ref[0], preferred_element_type=jnp.float32) + b2_ref[0]

    # ---- residual + LayerNorm 2 (f32) ----
    z = _layer_norm(y + f, g2_ref[0], be2_ref[0])

    o_ref[...] = z.reshape(B, S, D).astype(o_ref.dtype)


def encoder_pallas(x, mask, layer_params, *, n_heads, d_k, d_v,
                   compute_dtype=jnp.float32):
    """Full Encoder stack forward in one pallas_call.

    x: (B, S, D)  activations
    mask: (B, 1, S) padding mask, 1.0 = attend, 0.0 = masked
    layer_params: list of per-layer dicts (wq,bq,wk,bk,wv,bv,wo,bo,g1,be1,w1,b1,w2,b2,g2,be2)
    """
    x = x.astype(jnp.float32)
    B, S, D = x.shape
    L = len(layer_params)

    def stack(name, dtype=None):
        a = jnp.stack([p[name] for p in layer_params], axis=0)
        return a.astype(dtype) if dtype is not None else a

    # Fuse Q/K/V weights & biases into one projection per layer.
    wqkv = jnp.stack([jnp.concatenate([p["wq"], p["wk"], p["wv"]], axis=1)
                      for p in layer_params], axis=0).astype(compute_dtype)  # (L, D, 2Hdk+Hdv)
    bqkv = jnp.stack([jnp.concatenate([p["bq"], p["bk"], p["bv"]], axis=1)
                      for p in layer_params], axis=0)                        # (L, 1, 2Hdk+Hdv)

    wo = stack("wo", compute_dtype)
    bo = stack("bo")
    g1, be1 = stack("g1"), stack("be1")
    w1, b1 = stack("w1", compute_dtype), stack("b1")
    w2, b2 = stack("w2", compute_dtype), stack("b2")
    g2, be2 = stack("g2"), stack("be2")

    # Additive attention bias: 0 where attended, -1e9 where padded.
    bias = (mask.astype(jnp.float32) - 1.0) * 1e9                            # (B, 1, S)

    params = [wqkv, bqkv, wo, bo, g1, be1, w1, b1, w2, b2, g2, be2]

    def layer_spec(a):
        # One layer slice per grid step: block (1, ...) indexed by the layer axis.
        return pl.BlockSpec((1,) + a.shape[1:],
                            lambda l: (l,) + (0,) * (a.ndim - 1))

    kernel = functools.partial(_encoder_stack_kernel,
                               n_heads=n_heads, d_k=d_k, d_v=d_v,
                               compute_dtype=compute_dtype)

    return pl.pallas_call(
        kernel,
        out_shape=jax.ShapeDtypeStruct((B, S, D), jnp.float32),
        grid_spec=pltpu.PrefetchScalarGridSpec(
            num_scalar_prefetch=0,
            grid=(L,),                               # layer axis: sequential (carried state)
            in_specs=[pl.BlockSpec((B, S, D), lambda l: (0, 0, 0)),   # x (used at layer 0)
                      pl.BlockSpec((B, 1, S), lambda l: (0, 0, 0))]   # additive mask bias
                     + [layer_spec(p) for p in params],
            # Same block index for every layer -> output stays resident in VMEM and
            # serves as the carried activation; written back to HBM once at the end.
            out_specs=pl.BlockSpec((B, S, D), lambda l: (0, 0, 0)),
        ),
        compiler_params=pltpu.CompilerParams(
            dimension_semantics=("arbitrary",),
            vmem_limit_bytes=32 * 1024 * 1024,
        ),
    )(x, bias, *params)


def init_encoder_params(key, n_layers, d_model, d_k, d_v, n_heads, d_ff):
    """Deterministic synthetic parameters (matching nn.Linear / nn.LayerNorm shapes)."""
    layers = []
    for _ in range(n_layers):
        keys = jax.random.split(key, 9)
        key = keys[0]

        def lin(k, fan_in, fan_out):
            lim = 1.0 / math.sqrt(fan_in)
            kw, kb = jax.random.split(k)
            w = jax.random.uniform(kw, (fan_in, fan_out), jnp.float32, -lim, lim)
            b = jax.random.uniform(kb, (1, fan_out), jnp.float32, -lim, lim)
            return w, b

        wq, bq = lin(keys[1], d_model, n_heads * d_k)
        wk, bk = lin(keys[2], d_model, n_heads * d_k)
        wv, bv = lin(keys[3], d_model, n_heads * d_v)
        wo, bo = lin(keys[4], n_heads * d_v, d_model)
        w1, b1 = lin(keys[5], d_model, d_ff)
        w2, b2 = lin(keys[6], d_ff, d_model)
        layers.append(dict(
            wq=wq, bq=bq, wk=wk, bk=bk, wv=wv, bv=bv, wo=wo, bo=bo,
            g1=jnp.ones((1, d_model), jnp.float32),
            be1=jnp.zeros((1, d_model), jnp.float32),
            w1=w1, b1=b1, w2=w2, b2=b2,
            g2=jnp.ones((1, d_model), jnp.float32),
            be2=jnp.zeros((1, d_model), jnp.float32),
        ))
    return layers


def encoder_ref(x, mask, layer_params, *, n_heads, d_k, d_v):
    """Pure-JAX reference (unfused weights) for sanity checking."""
    out = x
    for p in layer_params:
        B, S, _ = out.shape
        q = out @ p["wq"] + p["bq"]
        k = out @ p["wk"] + p["bk"]
        v = out @ p["wv"] + p["bv"]
        q = q.reshape(B, S, n_heads, d_k).transpose(0, 2, 1, 3)
        k = k.reshape(B, S, n_heads, d_k).transpose(0, 2, 1, 3)
        v = v.reshape(B, S, n_heads, d_v).transpose(0, 2, 1, 3)
        scores = jnp.einsum("bhqd,bhkd->bhqk", q, k) / math.sqrt(d_k)
        scores = jnp.where(mask[:, None, :, :] == 0.0, -1e9, scores)
        attn = jax.nn.softmax(scores, axis=-1)
        ao = jnp.einsum("bhqk,bhkd->bhqd", attn, v)
        ao = ao.transpose(0, 2, 1, 3).reshape(B, S, n_heads * d_v)
        ao = ao @ p["wo"] + p["bo"]
        y = out + ao
        mu = y.mean(-1, keepdims=True)
        var = ((y - mu) ** 2).mean(-1, keepdims=True)
        y = (y - mu) / jnp.sqrt(var + 1e-5) * p["g1"] + p["be1"]
        f = jnp.maximum(y @ p["w1"] + p["b1"], 0.0) @ p["w2"] + p["b2"]
        z = y + f
        mu2 = z.mean(-1, keepdims=True)
        var2 = ((z - mu2) ** 2).mean(-1, keepdims=True)
        out = (z - mu2) / jnp.sqrt(var2 + 1e-5) * p["g2"] + p["be2"]
    return out


if __name__ == "__main__":
    # Small shapes consistent with the module's forward signature.
    B, S = 2, 8
    d_model, d_k, d_v, n_heads, d_ff, n_layers = 32, 16, 16, 4, 64, 2

    key = jax.random.PRNGKey(0)
    kx, kp = jax.random.split(key)
    x = jax.random.normal(kx, (B, S, d_model), jnp.float32)
    # Padding mask (B, 1, S): mask out the last position of batch element 1.
    mask = jnp.ones((B, 1, S), jnp.float32).at[1, 0, S - 1].set(0.0)

    layer_params = init_encoder_params(kp, n_layers, d_model, d_k, d_v, n_heads, d_ff)

    out = encoder_pallas(x, mask, layer_params,
                         n_heads=n_heads, d_k=d_k, d_v=d_v,
                         compute_dtype=jnp.float32)   # use jnp.bfloat16 on v6e/v7x at scale
    out = jax.block_until_ready(out)

    ref = encoder_ref(x, mask, layer_params, n_heads=n_heads, d_k=d_k, d_v=d_v)
    assert out.shape == (B, S, d_model)
    # Slightly relaxed tolerance: softmax denom uses EUP approx reciprocal.
    assert jnp.allclose(out, ref, atol=2e-3, rtol=2e-3), "mismatch vs reference"

    print("KERNEL_OK")
</pallas_src>

<mosaic_0001>
module attributes {stable_mosaic.version = 11 : i64} {
  func.func @_encoder_stack_kernel(%arg0: i32, %arg1: memref<2x8x32xf32, #tpu.memory_space<vmem>>, %arg2: memref<2x1x8xf32, #tpu.memory_space<vmem>>, %arg3: memref<1x32x192xf32, #tpu.memory_space<vmem>>, %arg4: memref<1x1x192xf32, #tpu.memory_space<vmem>>, %arg5: memref<1x64x32xf32, #tpu.memory_space<vmem>>, %arg6: memref<1x1x32xf32, #tpu.memory_space<vmem>>, %arg7: memref<1x1x32xf32, #tpu.memory_space<vmem>>, %arg8: memref<1x1x32xf32, #tpu.memory_space<vmem>>, %arg9: memref<1x32x64xf32, #tpu.memory_space<vmem>>, %arg10: memref<1x1x64xf32, #tpu.memory_space<vmem>>, %arg11: memref<1x64x32xf32, #tpu.memory_space<vmem>>, %arg12: memref<1x1x32xf32, #tpu.memory_space<vmem>>, %arg13: memref<1x1x32xf32, #tpu.memory_space<vmem>>, %arg14: memref<1x1x32xf32, #tpu.memory_space<vmem>>, %arg15: memref<2x8x32xf32, #tpu.memory_space<vmem>>) attributes {dimension_semantics = [#tpu.dimension_semantics<arbitrary>], iteration_bounds = array<i64: 2>, scalar_prefetch = 0 : i64, scratch_operands = 0 : i64, tpu.core_type = #tpu.core_type<tc>, window_params = [{pipeline_mode = #tpu.pipeline_mode<synchronous>, transform_indices = @transform_0, window_bounds = array<i64: 2, 8, 32>}, {pipeline_mode = #tpu.pipeline_mode<synchronous>, transform_indices = @transform_1, window_bounds = array<i64: 2, 1, 8>}, {transform_indices = @transform_2, window_bounds = array<i64: 1, 32, 192>}, {transform_indices = @transform_3, window_bounds = array<i64: 1, 1, 192>}, {transform_indices = @transform_4, window_bounds = array<i64: 1, 64, 32>}, {transform_indices = @transform_5, window_bounds = array<i64: 1, 1, 32>}, {transform_indices = @transform_6, window_bounds = array<i64: 1, 1, 32>}, {transform_indices = @transform_7, window_bounds = array<i64: 1, 1, 32>}, {transform_indices = @transform_8, window_bounds = array<i64: 1, 32, 64>}, {transform_indices = @transform_9, window_bounds = array<i64: 1, 1, 64>}, {transform_indices = @transform_10, window_bounds = array<i64: 1, 64, 32>}, {transform_indices = @transform_11, window_bounds = array<i64: 1, 1, 32>}, {transform_indices = @transform_12, window_bounds = array<i64: 1, 1, 32>}, {transform_indices = @transform_13, window_bounds = array<i64: 1, 1, 32>}, {pipeline_mode = #tpu.pipeline_mode<synchronous>, transform_indices = @transform_14, window_bounds = array<i64: 2, 8, 32>}]} {
    %c0_i32 = arith.constant 0 : i32
    %0 = arith.cmpi eq, %arg0, %c0_i32 : i32
    %1 = arith.extui %0 : i1 to i32
    %c0_i32_0 = arith.constant 0 : i32
    %2 = arith.cmpi ne, %1, %c0_i32_0 : i32
    scf.if %2 {
      %c0_79 = arith.constant 0 : index
      %c0_80 = arith.constant 0 : index
      %c0_81 = arith.constant 0 : index
      %176 = vector.load %arg1[%c0_79, %c0_80, %c0_81] : memref<2x8x32xf32, #tpu.memory_space<vmem>>, vector<2x8x32xf32>
      %c0_82 = arith.constant 0 : index
      %c0_83 = arith.constant 0 : index
      %c0_84 = arith.constant 0 : index
      %177 = vector.load %arg15[%c0_82, %c0_83, %c0_84] : memref<2x8x32xf32, #tpu.memory_space<vmem>>, vector<2x8x32xf32>
      tpu.vector_store %arg15[%c0_82, %c0_83, %c0_84], %176 {strides = array<i32>} : memref<2x8x32xf32, #tpu.memory_space<vmem>>, vector<2x8x32xf32>,
    } else {
    }
    %c0 = arith.constant 0 : index
    %c0_1 = arith.constant 0 : index
    %c0_2 = arith.constant 0 : index
    %3 = vector.load %arg15[%c0, %c0_1, %c0_2] : memref<2x8x32xf32, #tpu.memory_space<vmem>>, vector<2x8x32xf32>
    %4 = vector.shape_cast %3 : vector<2x8x32xf32> to vector<16x32xf32>
    %c0_3 = arith.constant 0 : index
    %c0_4 = arith.constant 0 : index
    %c0_5 = arith.constant 0 : index
    %5 = vector.load %arg3[%c0_3, %c0_4, %c0_5] : memref<1x32x192xf32, #tpu.memory_space<vmem>>, vector<1x32x192xf32>
    %6 = vector.shape_cast %5 : vector<1x32x192xf32> to vector<32x192xf32>
    %cst = arith.constant dense<0.000000e+00> : vector<16x192xf32>
    %7 = tpu.matmul %4, %6, %cst {dimension_numbers = #tpu.dot_dimension_numbers<[1], [0], [0], [1], [0, 0, 1, 1], [], []>} : vector<16x32xf32>, vector<32x192xf32>, vector<16x192xf32> -> vector<16x192xf32>
    %c0_6 = arith.constant 0 : index
    %c0_7 = arith.constant 0 : index
    %c0_8 = arith.constant 0 : index
    %8 = vector.load %arg4[%c0_6, %c0_7, %c0_8] : memref<1x1x192xf32, #tpu.memory_space<vmem>>, vector<1x1x192xf32>
    %9 = vector.shape_cast %8 : vector<1x1x192xf32> to vector<1x192xf32>
    %10 = vector.broadcast %9 : vector<1x192xf32> to vector<16x192xf32>
    %11 = arith.addf %7, %10 : vector<16x192xf32>
    %12 = vector.extract_strided_slice %11 {offsets = [0, 0], sizes = [16, 64], strides = [1, 1]} : vector<16x192xf32> to vector<16x64xf32>
    %13 = vector.shape_cast %12 : vector<16x64xf32> to vector<2x8x64xf32>
    %14 = vector.extract_strided_slice %11 {offsets = [0, 64], sizes = [16, 64], strides = [1, 1]} : vector<16x192xf32> to vector<16x64xf32>
    %15 = vector.shape_cast %14 : vector<16x64xf32> to vector<2x8x64xf32>
    %16 = vector.extract_strided_slice %11 {offsets = [0, 128], sizes = [16, 64], strides = [1, 1]} : vector<16x192xf32> to vector<16x64xf32>
    %17 = vector.shape_cast %16 : vector<16x64xf32> to vector<2x8x64xf32>
    %c0_9 = arith.constant 0 : index
    %c0_10 = arith.constant 0 : index
    %c0_11 = arith.constant 0 : index
    %18 = vector.load %arg2[%c0_9, %c0_10, %c0_11] : memref<2x1x8xf32, #tpu.memory_space<vmem>>, vector<2x1x8xf32>
    %19 = vector.extract_strided_slice %13 {offsets = [0, 0, 0], sizes = [2, 8, 16], strides = [1, 1, 1]} : vector<2x8x64xf32> to vector<2x8x16xf32>
    %20 = vector.extract_strided_slice %15 {offsets = [0, 0, 0], sizes = [2, 8, 16], strides = [1, 1, 1]} : vector<2x8x64xf32> to vector<2x8x16xf32>
    %21 = vector.extract_strided_slice %17 {offsets = [0, 0, 0], sizes = [2, 8, 16], strides = [1, 1, 1]} : vector<2x8x64xf32> to vector<2x8x16xf32>
    %cst_12 = arith.constant dense<0.000000e+00> : vector<2x8x8xf32>
    %22 = tpu.matmul %19, %20, %cst_12 {dimension_numbers = #tpu.dot_dimension_numbers<[2], [2], [1], [1], [0, 0, 0, 1, 1, 1], [0], [0]>} : vector<2x8x16xf32>, vector<2x8x16xf32>, vector<2x8x8xf32> -> vector<2x8x8xf32>
    %cst_13 = arith.constant 2.500000e-01 : f32
    %23 = vector.broadcast %cst_13 : f32 to vector<2x8x8xf32>
    %24 = arith.mulf %22, %23 : vector<2x8x8xf32>
    %25 = vector.broadcast %18 : vector<2x1x8xf32> to vector<2x8x8xf32>
    %26 = arith.addf %24, %25 : vector<2x8x8xf32>
    %cst_14 = arith.constant dense<0xFF800000> : vector<2x8xf32>
    %27 = vector.multi_reduction <maximumf>, %26, %cst_14 [2] : vector<2x8x8xf32> to vector<2x8xf32>
    %28 = vector.shape_cast %27 : vector<2x8xf32> to vector<2x8x1xf32>
    %29 = vector.broadcast %28 : vector<2x8x1xf32> to vector<2x8x8xf32>
    %30 = arith.subf %26, %29 : vector<2x8x8xf32>
    %31 = math.exp %30 : vector<2x8x8xf32>
    %cst_15 = arith.constant dense<0.000000e+00> : vector<2x8xf32>
    %32 = vector.multi_reduction <add>, %31, %cst_15 [2] : vector<2x8x8xf32> to vector<2x8xf32>
    %33 = vector.shape_cast %32 : vector<2x8xf32> to vector<2x8x1xf32>
    %34 = tpu.reciprocal %33 {approx = true} : vector<2x8x1xf32> -> vector<2x8x1xf32>
    %35 = vector.broadcast %34 : vector<2x8x1xf32> to vector<2x8x8xf32>
    %36 = arith.mulf %31, %35 : vector<2x8x8xf32>
    %cst_16 = arith.constant dense<0.000000e+00> : vector<2x8x16xf32>
    %37 = tpu.matmul %36, %21, %cst_16 {dimension_numbers = #tpu.dot_dimension_numbers<[2], [1], [1], [2], [0, 0, 0, 1, 1, 2], [0], [0]>} : vector<2x8x8xf32>, vector<2x8x16xf32>, vector<2x8x16xf32> -> vector<2x8x16xf32>
    %38 = vector.extract_strided_slice %13 {offsets = [0, 0, 16], sizes = [2, 8, 16], strides = [1, 1, 1]} : vector<2x8x64xf32> to vector<2x8x16xf32>
    %39 = vector.extract_strided_slice %15 {offsets = [0, 0, 16], sizes = [2, 8, 16], strides = [1, 1, 1]} : vector<2x8x64xf32> to vector<2x8x16xf32>
    %40 = vector.extract_strided_slice %17 {offsets = [0, 0, 16], sizes = [2, 8, 16], strides = [1, 1, 1]} : vector<2x8x64xf32> to vector<2x8x16xf32>
    %cst_17 = arith.constant dense<0.000000e+00> : vector<2x8x8xf32>
    %41 = tpu.matmul %38, %39, %cst_17 {dimension_numbers = #tpu.dot_dimension_numbers<[2], [2], [1], [1], [0, 0, 0, 1, 1, 1], [0], [0]>} : vector<2x8x16xf32>, vector<2x8x16xf32>, vector<2x8x8xf32> -> vector<2x8x8xf32>
    %cst_18 = arith.constant 2.500000e-01 : f32
    %42 = vector.broadcast %cst_18 : f32 to vector<2x8x8xf32>
    %43 = arith.mulf %41, %42 : vector<2x8x8xf32>
    %44 = vector.broadcast %18 : vector<2x1x8xf32> to vector<2x8x8xf32>
    %45 = arith.addf %43, %44 : vector<2x8x8xf32>
    %cst_19 = arith.constant dense<0xFF800000> : vector<2x8xf32>
    %46 = vector.multi_reduction <maximumf>, %45, %cst_19 [2] : vector<2x8x8xf32> to vector<2x8xf32>
    %47 = vector.shape_cast %46 : vector<2x8xf32> to vector<2x8x1xf32>
    %48 = vector.broadcast %47 : vector<2x8x1xf32> to vector<2x8x8xf32>
    %49 = arith.subf %45, %48 : vector<2x8x8xf32>
    %50 = math.exp %49 : vector<2x8x8xf32>
    %cst_20 = arith.constant dense<0.000000e+00> : vector<2x8xf32>
    %51 = vector.multi_reduction <add>, %50, %cst_20 [2] : vector<2x8x8xf32> to vector<2x8xf32>
    %52 = vector.shape_cast %51 : vector<2x8xf32> to vector<2x8x1xf32>
    %53 = tpu.reciprocal %52 {approx = true} : vector<2x8x1xf32> -> vector<2x8x1xf32>
    %54 = vector.broadcast %53 : vector<2x8x1xf32> to vector<2x8x8xf32>
    %55 = arith.mulf %50, %54 : vector<2x8x8xf32>
    %cst_21 = arith.constant dense<0.000000e+00> : vector<2x8x16xf32>
    %56 = tpu.matmul %55, %40, %cst_21 {dimension_numbers = #tpu.dot_dimension_numbers<[2], [1], [1], [2], [0, 0, 0, 1, 1, 2], [0], [0]>} : vector<2x8x8xf32>, vector<2x8x16xf32>, vector<2x8x16xf32> -> vector<2x8x16xf32>
    %57 = vector.extract_strided_slice %13 {offsets = [0, 0, 32], sizes = [2, 8, 16], strides = [1, 1, 1]} : vector<2x8x64xf32> to vector<2x8x16xf32>
    %58 = vector.extract_strided_slice %15 {offsets = [0, 0, 32], sizes = [2, 8, 16], strides = [1, 1, 1]} : vector<2x8x64xf32> to vector<2x8x16xf32>
    %59 = vector.extract_strided_slice %17 {offsets = [0, 0, 32], sizes = [2, 8, 16], strides = [1, 1, 1]} : vector<2x8x64xf32> to vector<2x8x16xf32>
    %cst_22 = arith.constant dense<0.000000e+00> : vector<2x8x8xf32>
    %60 = tpu.matmul %57, %58, %cst_22 {dimension_numbers = #tpu.dot_dimension_numbers<[2], [2], [1], [1], [0, 0, 0, 1, 1, 1], [0], [0]>} : vector<2x8x16xf32>, vector<2x8x16xf32>, vector<2x8x8xf32> -> vector<2x8x8xf32>
    %cst_23 = arith.constant 2.500000e-01 : f32
    %61 = vector.broadcast %cst_23 : f32 to vector<2x8x8xf32>
    %62 = arith.mulf %60, %61 : vector<2x8x8xf32>
    %63 = vector.broadcast %18 : vector<2x1x8xf32> to vector<2x8x8xf32>
    %64 = arith.addf %62, %63 : vector<2x8x8xf32>
    %cst_24 = arith.constant dense<0xFF800000> : vector<2x8xf32>
    %65 = vector.multi_reduction <maximumf>, %64, %cst_24 [2] : vector<2x8x8xf32> to vector<2x8xf32>
    %66 = vector.shape_cast %65 : vector<2x8xf32> to vector<2x8x1xf32>
    %67 = vector.broadcast %66 : vector<2x8x1xf32> to vector<2x8x8xf32>
    %68 = arith.subf %64, %67 : vector<2x8x8xf32>
    %69 = math.exp %68 : vector<2x8x8xf32>
    %cst_25 = arith.constant dense<0.000000e+00> : vector<2x8xf32>
    %70 = vector.multi_reduction <add>, %69, %cst_25 [2] : vector<2x8x8xf32> to vector<2x8xf32>
    %71 = vector.shape_cast %70 : vector<2x8xf32> to vector<2x8x1xf32>
    %72 = tpu.reciprocal %71 {approx = true} : vector<2x8x1xf32> -> vector<2x8x1xf32>
    %73 = vector.broadcast %72 : vector<2x8x1xf32> to vector<2x8x8xf32>
    %74 = arith.mulf %69, %73 : vector<2x8x8xf32>
    %cst_26 = arith.constant dense<0.000000e+00> : vector<2x8x16xf32>
    %75 = tpu.matmul %74, %59, %cst_26 {dimension_numbers = #tpu.dot_dimension_numbers<[2], [1], [1], [2], [0, 0, 0, 1, 1, 2], [0], [0]>} : vector<2x8x8xf32>, vector<2x8x16xf32>, vector<2x8x16xf32> -> vector<2x8x16xf32>
    %76 = vector.extract_strided_slice %13 {offsets = [0, 0, 48], sizes = [2, 8, 16], strides = [1, 1, 1]} : vector<2x8x64xf32> to vector<2x8x16xf32>
    %77 = vector.extract_strided_slice %15 {offsets = [0, 0, 48], sizes = [2, 8, 16], strides = [1, 1, 1]} : vector<2x8x64xf32> to vector<2x8x16xf32>
    %78 = vector.extract_strided_slice %17 {offsets = [0, 0, 48], sizes = [2, 8, 16], strides = [1, 1, 1]} : vector<2x8x64xf32> to vector<2x8x16xf32>
    %cst_27 = arith.constant dense<0.000000e+00> : vector<2x8x8xf32>
    %79 = tpu.matmul %76, %77, %cst_27 {dimension_numbers = #tpu.dot_dimension_numbers<[2], [2], [1], [1], [0, 0, 0, 1, 1, 1], [0], [0]>} : vector<2x8x16xf32>, vector<2x8x16xf32>, vector<2x8x8xf32> -> vector<2x8x8xf32>
    %cst_28 = arith.constant 2.500000e-01 : f32
    %80 = vector.broadcast %cst_28 : f32 to vector<2x8x8xf32>
    %81 = arith.mulf %79, %80 : vector<2x8x8xf32>
    %82 = vector.broadcast %18 : vector<2x1x8xf32> to vector<2x8x8xf32>
    %83 = arith.addf %81, %82 : vector<2x8x8xf32>
    %cst_29 = arith.constant dense<0xFF800000> : vector<2x8xf32>
    %84 = vector.multi_reduction <maximumf>, %83, %cst_29 [2] : vector<2x8x8xf32> to vector<2x8xf32>
    %85 = vector.shape_cast %84 : vector<2x8xf32> to vector<2x8x1xf32>
    %86 = vector.broadcast %85 : vector<2x8x1xf32> to vector<2x8x8xf32>
    %87 = arith.subf %83, %86 : vector<2x8x8xf32>
    %88 = math.exp %87 : vector<2x8x8xf32>
    %cst_30 = arith.constant dense<0.000000e+00> : vector<2x8xf32>
    %89 = vector.multi_reduction <add>, %88, %cst_30 [2] : vector<2x8x8xf32> to vector<2x8xf32>
    %90 = vector.shape_cast %89 : vector<2x8xf32> to vector<2x8x1xf32>
    %91 = tpu.reciprocal %90 {approx = true} : vector<2x8x1xf32> -> vector<2x8x1xf32>
    %92 = vector.broadcast %91 : vector<2x8x1xf32> to vector<2x8x8xf32>
    %93 = arith.mulf %88, %92 : vector<2x8x8xf32>
    %cst_31 = arith.constant dense<0.000000e+00> : vector<2x8x16xf32>
    %94 = tpu.matmul %93, %78, %cst_31 {dimension_numbers = #tpu.dot_dimension_numbers<[2], [1], [1], [2], [0, 0, 0, 1, 1, 2], [0], [0]>} : vector<2x8x8xf32>, vector<2x8x16xf32>, vector<2x8x16xf32> -> vector<2x8x16xf32>
    %95 = tpu.concatenate %37, %56, %75, %94 in 2 : vector<2x8x16xf32>, vector<2x8x16xf32>, vector<2x8x16xf32>, vector<2x8x16xf32> -> vector<2x8x64xf32>
    %96 = vector.shape_cast %95 : vector<2x8x64xf32> to vector<16x64xf32>
    %c0_32 = arith.constant 0 : index
    %c0_33 = arith.constant 0 : index
    %c0_34 = arith.constant 0 : index
    %97 = vector.load %arg5[%c0_32, %c0_33, %c0_34] : memref<1x64x32xf32, #tpu.memory_space<vmem>>, vector<1x64x32xf32>
    %98 = vector.shape_cast %97 : vector<1x64x32xf32> to vector<64x32xf32>
    %cst_35 = arith.constant dense<0.000000e+00> : vector<16x32xf32>
    %99 = tpu.matmul %96, %98, %cst_35 {dimension_numbers = #tpu.dot_dimension_numbers<[1], [0], [0], [1], [0, 0, 1, 1], [], []>} : vector<16x64xf32>, vector<64x32xf32>, vector<16x32xf32> -> vector<16x32xf32>
    %c0_36 = arith.constant 0 : index
    %c0_37 = arith.constant 0 : index
    %c0_38 = arith.constant 0 : index
    %100 = vector.load %arg6[%c0_36, %c0_37, %c0_38] : memref<1x1x32xf32, #tpu.memory_space<vmem>>, vector<1x1x32xf32>
    %101 = vector.shape_cast %100 : vector<1x1x32xf32> to vector<1x32xf32>
    %102 = vector.broadcast %101 : vector<1x32xf32> to vector<16x32xf32>
    %103 = arith.addf %99, %102 : vector<16x32xf32>
    %104 = arith.addf %4, %103 : vector<16x32xf32>
    %c0_39 = arith.constant 0 : index
    %c0_40 = arith.constant 0 : index
    %c0_41 = arith.constant 0 : index
    %105 = vector.load %arg7[%c0_39, %c0_40, %c0_41] : memref<1x1x32xf32, #tpu.memory_space<vmem>>, vector<1x1x32xf32>
    %106 = vector.shape_cast %105 : vector<1x1x32xf32> to vector<1x32xf32>
    %c0_42 = arith.constant 0 : index
    %c0_43 = arith.constant 0 : index
    %c0_44 = arith.constant 0 : index
    %107 = vector.load %arg8[%c0_42, %c0_43, %c0_44] : memref<1x1x32xf32, #tpu.memory_space<vmem>>, vector<1x1x32xf32>
    %108 = vector.shape_cast %107 : vector<1x1x32xf32> to vector<1x32xf32>
    %cst_45 = arith.constant dense<0.000000e+00> : vector<16xf32>
    %109 = vector.multi_reduction <add>, %104, %cst_45 [1] : vector<16x32xf32> to vector<16xf32>
    %110 = vector.shape_cast %109 : vector<16xf32> to vector<16x1xf32>
    %cst_46 = arith.constant 3.200000e+01 : f32
    %111 = vector.broadcast %cst_46 : f32 to vector<16x1xf32>
    %112 = arith.divf %110, %111 : vector<16x1xf32>
    %113 = vector.broadcast %112 : vector<16x1xf32> to vector<16x32xf32>
    %114 = arith.subf %104, %113 : vector<16x32xf32>
    %115 = arith.mulf %114, %114 : vector<16x32xf32>
    %cst_47 = arith.constant dense<0.000000e+00> : vector<16xf32>
    %116 = vector.multi_reduction <add>, %115, %cst_47 [1] : vector<16x32xf32> to vector<16xf32>
    %117 = vector.shape_cast %116 : vector<16xf32> to vector<16x1xf32>
    %cst_48 = arith.constant 3.200000e+01 : f32
    %118 = vector.broadcast %cst_48 : f32 to vector<16x1xf32>
    %119 = arith.divf %117, %118 : vector<16x1xf32>
    %120 = vector.broadcast %112 : vector<16x1xf32> to vector<16x32xf32>
    %121 = arith.subf %104, %120 : vector<16x32xf32>
    %cst_49 = arith.constant 9.99999974E-6 : f32
    %122 = vector.broadcast %cst_49 : f32 to vector<16x1xf32>
    %123 = arith.addf %119, %122 : vector<16x1xf32>
    %124 = math.rsqrt %123 : vector<16x1xf32>
    %125 = vector.broadcast %124 : vector<16x1xf32> to vector<16x32xf32>
    %126 = arith.mulf %121, %125 : vector<16x32xf32>
    %127 = vector.broadcast %106 : vector<1x32xf32> to vector<16x32xf32>
    %128 = arith.mulf %126, %127 : vector<16x32xf32>
    %129 = vector.broadcast %108 : vector<1x32xf32> to vector<16x32xf32>
    %130 = arith.addf %128, %129 : vector<16x32xf32>
    %c0_50 = arith.constant 0 : index
    %c0_51 = arith.constant 0 : index
    %c0_52 = arith.constant 0 : index
    %131 = vector.load %arg9[%c0_50, %c0_51, %c0_52] : memref<1x32x64xf32, #tpu.memory_space<vmem>>, vector<1x32x64xf32>
    %132 = vector.shape_cast %131 : vector<1x32x64xf32> to vector<32x64xf32>
    %cst_53 = arith.constant dense<0.000000e+00> : vector<16x64xf32>
    %133 = tpu.matmul %130, %132, %cst_53 {dimension_numbers = #tpu.dot_dimension_numbers<[1], [0], [0], [1], [0, 0, 1, 1], [], []>} : vector<16x32xf32>, vector<32x64xf32>, vector<16x64xf32> -> vector<16x64xf32>
    %c0_54 = arith.constant 0 : index
    %c0_55 = arith.constant 0 : index
    %c0_56 = arith.constant 0 : index
    %134 = vector.load %arg10[%c0_54, %c0_55, %c0_56] : memref<1x1x64xf32, #tpu.memory_space<vmem>>, vector<1x1x64xf32>
    %135 = vector.shape_cast %134 : vector<1x1x64xf32> to vector<1x64xf32>
    %136 = vector.broadcast %135 : vector<1x64xf32> to vector<16x64xf32>
    %137 = arith.addf %133, %136 : vector<16x64xf32>
    %cst_57 = arith.constant 0.000000e+00 : f32
    %138 = vector.broadcast %cst_57 : f32 to vector<16x64xf32>
    %139 = arith.maximumf %137, %138 : vector<16x64xf32>
    %c0_58 = arith.constant 0 : index
    %c0_59 = arith.constant 0 : index
    %c0_60 = arith.constant 0 : index
    %140 = vector.load %arg11[%c0_58, %c0_59, %c0_60] : memref<1x64x32xf32, #tpu.memory_space<vmem>>, vector<1x64x32xf32>
    %141 = vector.shape_cast %140 : vector<1x64x32xf32> to vector<64x32xf32>
    %cst_61 = arith.constant dense<0.000000e+00> : vector<16x32xf32>
    %142 = tpu.matmul %139, %141, %cst_61 {dimension_numbers = #tpu.dot_dimension_numbers<[1], [0], [0], [1], [0, 0, 1, 1], [], []>} : vector<16x64xf32>, vector<64x32xf32>, vector<16x32xf32> -> vector<16x32xf32>
    %c0_62 = arith.constant 0 : index
    %c0_63 = arith.constant 0 : index
    %c0_64 = arith.constant 0 : index
    %143 = vector.load %arg12[%c0_62, %c0_63, %c0_64] : memref<1x1x32xf32, #tpu.memory_space<vmem>>, vector<1x1x32xf32>
    %144 = vector.shape_cast %143 : vector<1x1x32xf32> to vector<1x32xf32>
    %145 = vector.broadcast %144 : vector<1x32xf32> to vector<16x32xf32>
    %146 = arith.addf %142, %145 : vector<16x32xf32>
    %147 = arith.addf %130, %146 : vector<16x32xf32>
    %c0_65 = arith.constant 0 : index
    %c0_66 = arith.constant 0 : index
    %c0_67 = arith.constant 0 : index
    %148 = vector.load %arg13[%c0_65, %c0_66, %c0_67] : memref<1x1x32xf32, #tpu.memory_space<vmem>>, vector<1x1x32xf32>
    %149 = vector.shape_cast %148 : vector<1x1x32xf32> to vector<1x32xf32>
    %c0_68 = arith.constant 0 : index
    %c0_69 = arith.constant 0 : index
    %c0_70 = arith.constant 0 : index
    %150 = vector.load %arg14[%c0_68, %c0_69, %c0_70] : memref<1x1x32xf32, #tpu.memory_space<vmem>>, vector<1x1x32xf32>
    %151 = vector.shape_cast %150 : vector<1x1x32xf32> to vector<1x32xf32>
    %cst_71 = arith.constant dense<0.000000e+00> : vector<16xf32>
    %152 = vector.multi_reduction <add>, %147, %cst_71 [1] : vector<16x32xf32> to vector<16xf32>
    %153 = vector.shape_cast %152 : vector<16xf32> to vector<16x1xf32>
    %cst_72 = arith.constant 3.200000e+01 : f32
    %154 = vector.broadcast %cst_72 : f32 to vector<16x1xf32>
    %155 = arith.divf %153, %154 : vector<16x1xf32>
    %156 = vector.broadcast %155 : vector<16x1xf32> to vector<16x32xf32>
    %157 = arith.subf %147, %156 : vector<16x32xf32>
    %158 = arith.mulf %157, %157 : vector<16x32xf32>
    %cst_73 = arith.constant dense<0.000000e+00> : vector<16xf32>
    %159 = vector.multi_reduction <add>, %158, %cst_73 [1] : vector<16x32xf32> to vector<16xf32>
    %160 = vector.shape_cast %159 : vector<16xf32> to vector<16x1xf32>
    %cst_74 = arith.constant 3.200000e+01 : f32
    %161 = vector.broadcast %cst_74 : f32 to vector<16x1xf32>
    %162 = arith.divf %160, %161 : vector<16x1xf32>
    %163 = vector.broadcast %155 : vector<16x1xf32> to vector<16x32xf32>
    %164 = arith.subf %147, %163 : vector<16x32xf32>
    %cst_75 = arith.constant 9.99999974E-6 : f32
    %165 = vector.broadcast %cst_75 : f32 to vector<16x1xf32>
    %166 = arith.addf %162, %165 : vector<16x1xf32>
    %167 = math.rsqrt %166 : vector<16x1xf32>
    %168 = vector.broadcast %167 : vector<16x1xf32> to vector<16x32xf32>
    %169 = arith.mulf %164, %168 : vector<16x32xf32>
    %170 = vector.broadcast %149 : vector<1x32xf32> to vector<16x32xf32>
    %171 = arith.mulf %169, %170 : vector<16x32xf32>
    %172 = vector.broadcast %151 : vector<1x32xf32> to vector<16x32xf32>
    %173 = arith.addf %171, %172 : vector<16x32xf32>
    %174 = vector.shape_cast %173 : vector<16x32xf32> to vector<2x8x32xf32>
    %c0_76 = arith.constant 0 : index
    %c0_77 = arith.constant 0 : index
    %c0_78 = arith.constant 0 : index
    %175 = vector.load %arg15[%c0_76, %c0_77, %c0_78] : memref<2x8x32xf32, #tpu.memory_space<vmem>>, vector<2x8x32xf32>
    tpu.vector_store %arg15[%c0_76, %c0_77, %c0_78], %174 {strides = array<i32>} : memref<2x8x32xf32, #tpu.memory_space<vmem>>, vector<2x8x32xf32>,
    return
  }
  func.func @transform_0(%arg0: i32) -> (i32, i32, i32) {
    %c0_i32 = arith.constant 0 : i32
    %c0_i32_0 = arith.constant 0 : i32
    %c0_i32_1 = arith.constant 0 : i32
    %c0_i32_2 = arith.constant 0 : i32
    return %c0_i32, %c0_i32_0, %c0_i32_1 : i32, i32, i32
  }
  func.func @transform_1(%arg0: i32) -> (i32, i32, i32) {
    %c0_i32 = arith.constant 0 : i32
    %c0_i32_0 = arith.constant 0 : i32
    %c0_i32_1 = arith.constant 0 : i32
    %c0_i32_2 = arith.constant 0 : i32
    return %c0_i32, %c0_i32_0, %c0_i32_1 : i32, i32, i32
  }
  func.func @transform_2(%arg0: i32) -> (i32, i32, i32) {
    %c0_i32 = arith.constant 0 : i32
    %c0_i32_0 = arith.constant 0 : i32
    %c0_i32_1 = arith.constant 0 : i32
    return %arg0, %c0_i32, %c0_i32_0 : i32, i32, i32
  }
  func.func @transform_3(%arg0: i32) -> (i32, i32, i32) {
    %c0_i32 = arith.constant 0 : i32
    %c0_i32_0 = arith.constant 0 : i32
    %c0_i32_1 = arith.constant 0 : i32
    return %arg0, %c0_i32, %c0_i32_0 : i32, i32, i32
  }
  func.func @transform_4(%arg0: i32) -> (i32, i32, i32) {
    %c0_i32 = arith.constant 0 : i32
    %c0_i32_0 = arith.constant 0 : i32
    %c0_i32_1 = arith.constant 0 : i32
    return %arg0, %c0_i32, %c0_i32_0 : i32, i32, i32
  }
  func.func @transform_5(%arg0: i32) -> (i32, i32, i32) {
    %c0_i32 = arith.constant 0 : i32
    %c0_i32_0 = arith.constant 0 : i32
    %c0_i32_1 = arith.constant 0 : i32
    return %arg0, %c0_i32, %c0_i32_0 : i32, i32, i32
  }
  func.func @transform_6(%arg0: i32) -> (i32, i32, i32) {
    %c0_i32 = arith.constant 0 : i32
    %c0_i32_0 = arith.constant 0 : i32
    %c0_i32_1 = arith.constant 0 : i32
    return %arg0, %c0_i32, %c0_i32_0 : i32, i32, i32
  }
  func.func @transform_7(%arg0: i32) -> (i32, i32, i32) {
    %c0_i32 = arith.constant 0 : i32
    %c0_i32_0 = arith.constant 0 : i32
    %c0_i32_1 = arith.constant 0 : i32
    return %arg0, %c0_i32, %c0_i32_0 : i32, i32, i32
  }
  func.func @transform_8(%arg0: i32) -> (i32, i32, i32) {
    %c0_i32 = arith.constant 0 : i32
    %c0_i32_0 = arith.constant 0 : i32
    %c0_i32_1 = arith.constant 0 : i32
    return %arg0, %c0_i32, %c0_i32_0 : i32, i32, i32
  }
  func.func @transform_9(%arg0: i32) -> (i32, i32, i32) {
    %c0_i32 = arith.constant 0 : i32
    %c0_i32_0 = arith.constant 0 : i32
    %c0_i32_1 = arith.constant 0 : i32
    return %arg0, %c0_i32, %c0_i32_0 : i32, i32, i32
  }
  func.func @transform_10(%arg0: i32) -> (i32, i32, i32) {
    %c0_i32 = arith.constant 0 : i32
    %c0_i32_0 = arith.constant 0 : i32
    %c0_i32_1 = arith.constant 0 : i32
    return %arg0, %c0_i32, %c0_i32_0 : i32, i32, i32
  }
  func.func @transform_11(%arg0: i32) -> (i32, i32, i32) {
    %c0_i32 = arith.constant 0 : i32
    %c0_i32_0 = arith.constant 0 : i32
    %c0_i32_1 = arith.constant 0 : i32
    return %arg0, %c0_i32, %c0_i32_0 : i32, i32, i32
  }
  func.func @transform_12(%arg0: i32) -> (i32, i32, i32) {
    %c0_i32 = arith.constant 0 : i32
    %c0_i32_0 = arith.constant 0 : i32
    %c0_i32_1 = arith.constant 0 : i32
    return %arg0, %c0_i32, %c0_i32_0 : i32, i32, i32
  }
  func.func @transform_13(%arg0: i32) -> (i32, i32, i32) {
    %c0_i32 = arith.constant 0 : i32
    %c0_i32_0 = arith.constant 0 : i32
    %c0_i32_1 = arith.constant 0 : i32
    return %arg0, %c0_i32, %c0_i32_0 : i32, i32, i32
  }
  func.func @transform_14(%arg0: i32) -> (i32, i32, i32) {
    %c0_i32 = arith.constant 0 : i32
    %c0_i32_0 = arith.constant 0 : i32
    %c0_i32_1 = arith.constant 0 : i32
    %c0_i32_2 = arith.constant 0 : i32
    return %c0_i32, %c0_i32_0, %c0_i32_1 : i32, i32, i32
  }
}

</mosaic_0001>

<llo_original>
// kernel: tpu_custom_call.1
$region0: #{tpu_custom_call.1}
  #allocation0 [shape = 'u32[]', space=smem, size = 0x4, offset = 0x4, fixed_abs, tag = 'smem constant byte address 0x4 - core index']
  #allocation1 [shape = 'u32[72,128]{1,0:T(1,128)}', space=vmem, size = 0x9000, scoped, tag = 'internal scratch']
  %s0 = inlined_call_operand.vmem [shape: f32[2,8,32], index: 0, kind: input, shape index: {}]
  %s1 = inlined_call_operand.vmem [shape: f32[2,1,8], index: 1, kind: input, shape index: {}]
  %s2 = inlined_call_operand.vmem [shape: f32[2,32,192], index: 2, kind: input, shape index: {}]
  %s3 = inlined_call_operand.vmem [shape: f32[2,1,192], index: 3, kind: input, shape index: {}]
  %s4 = inlined_call_operand.vmem [shape: f32[2,64,32], index: 4, kind: input, shape index: {}]
  %s5 = inlined_call_operand.vmem [shape: f32[2,1,32], index: 5, kind: input, shape index: {}]
  %s6 = inlined_call_operand.vmem [shape: f32[2,1,32], index: 6, kind: input, shape index: {}]
  %s7 = inlined_call_operand.vmem [shape: f32[2,1,32], index: 7, kind: input, shape index: {}]
  %s8 = inlined_call_operand.vmem [shape: f32[2,32,64], index: 8, kind: input, shape index: {}]
  %s9 = inlined_call_operand.vmem [shape: f32[2,1,64], index: 9, kind: input, shape index: {}]
  %s10 = inlined_call_operand.vmem [shape: f32[2,64,32], index: 10, kind: input, shape index: {}]
  %s11 = inlined_call_operand.vmem [shape: f32[2,1,32], index: 11, kind: input, shape index: {}]
  %s12 = inlined_call_operand.vmem [shape: f32[2,1,32], index: 12, kind: input, shape index: {}]
  %s13 = inlined_call_operand.vmem [shape: f32[2,1,32], index: 13, kind: input, shape index: {}]
  %s14 = inlined_call_operand.hbm [shape: f32[2,8,32], index: 14, kind: output, shape index: {}]
  %s15 = sld [smem:[#allocation0]]
  $region93: #{tpu_custom_call.1} parent=0
    _
  %s17 = ssub.s32 1, %s15
  %s18 = scalar_select 0, %s17, %s15
  $region1: #{tpu_custom_call.1} parent=0
    #allocation2 [shape = 'u8[8192]{0}', space=vmem, size = 0x2000, scoped, tag = 'output window, operand 0, single buffered']
    #allocation3 [shape = 's32[2]{0}', space=sflag, size = 0x8, scoped, tag = 'scoped memory for tpu_custom_call.1']
    %19 = vsyncpa [#allocation3], 0
    loop: start=0, step=1, limit=4
    $region2: #{tpu_custom_call.1} parent=1 // loop_pre_header
      _
    $region3: #{tpu_custom_call.1} parent=1 // loop_header
      %s21 = sphi 0, %s25
      %p22 = scmp.ge.s32.totalorder %s21, 4
      %s29 = sphi 0, %s29
      %s31 = sphi 0, %s29
      %s32 = sphi 0, %s31
      %s46 = sphi 0, %s32
      %s50 = sphi 0, %s50
      %s52 = sphi 0, %s50
      %s53 = sphi 0, %s52
      %s67 = sphi 0, %s53
      %s73 = sphi 0, %s75
      %s76 = sphi 0, %s73
      %s77 = sphi 0, %s76
      %s93 = sphi 0, %s77
      %s99 = sphi 0, %s101
      %s102 = sphi 0, %s99
      %s103 = sphi 0, %s102
      %s119 = sphi 0, %s103
      %s125 = sphi 0, %s127
      %s128 = sphi 0, %s125
      %s129 = sphi 0, %s128
      %s145 = sphi 0, %s129
      %s151 = sphi 0, %s153
      %s154 = sphi 0, %s151
      %s155 = sphi 0, %s154
      %s171 = sphi 0, %s155
      %s177 = sphi 0, %s179
      %s180 = sphi 0, %s177
      %s181 = sphi 0, %s180
      %s197 = sphi 0, %s181
      %s203 = sphi 0, %s205
      %s206 = sphi 0, %s203
      %s207 = sphi 0, %s206
      %s223 = sphi 0, %s207
      %s229 = sphi 0, %s231
      %s232 = sphi 0, %s229
      %s233 = sphi 0, %s232
      %s249 = sphi 0, %s233
      %s255 = sphi 0, %s257
      %s258 = sphi 0, %s255
      %s259 = sphi 0, %s258
      %s275 = sphi 0, %s259
      %s281 = sphi 0, %s283
      %s284 = sphi 0, %s281
      %s285 = sphi 0, %s284
      %s301 = sphi 0, %s285
      %s307 = sphi 0, %s309
      %s310 = sphi 0, %s307
      %s311 = sphi 0, %s310
      %s327 = sphi 0, %s311
      %s333 = sphi 0, %s335
      %s336 = sphi 0, %s333
      %s337 = sphi 0, %s336
      %s353 = sphi 0, %s337
      %s359 = sphi 0, %s361
      %s362 = sphi 0, %s359
      %s363 = sphi 0, %s362
      %s379 = sphi 0, %s363
      %s383 = sphi 0, %s383
      %s385 = sphi 0, %s383
      %s386 = sphi 0, %s385
      %s400 = sphi 0, %s386
    $region4: #{tpu_custom_call.1} parent=1 // loop_header_branch
      %24 = sbr.rel (%p22) target = $region8
    $region5: #{tpu_custom_call.1} parent=1 // loop_body
      %s26 = ssub.s32 %s21, 1
      %s27 = ssub.s32 %s21, 2
      %s28 = sadd.s32 %s21, 1
      %s30 = sadd.s32 %s29, 1
      %p33 = scmp.eq.s32.totalorder %s21, 1
      %p34 = scmp.ne.s32.totalorder %s29, %s31
      %p35 = scmp.eq.s32.totalorder %s21, 0
      %p36 = por %p34, %p35
      %p37 = scmp.ne.s32.totalorder %s29, %s31
      %p38 = scmp.eq.s32.totalorder %s26, 1
      %p39 = por %p37, %p38
      %p40 = scmp.ne.s32.totalorder %s31, %s32
      %p41 = scmp.eq.s32.totalorder %s26, 0
      %p42 = por %p40, %p41
      %p43 = scmp.ne.s32.totalorder %s31, %s32
      %p44 = scmp.eq.s32.totalorder %s27, 1
      %p45 = por %p43, %p44
      %p47 = scmp.ne.s32.totalorder %s32, %s46
      %p48 = scmp.eq.s32.totalorder %s27, 0
      %p49 = por %p47, %p48
      %s51 = sadd.s32 %s50, 1
      %p54 = scmp.eq.s32.totalorder %s21, 1
      %p55 = scmp.ne.s32.totalorder %s50, %s52
      %p56 = scmp.eq.s32.totalorder %s21, 0
      %p57 = por %p55, %p56
      %p58 = scmp.ne.s32.totalorder %s50, %s52
      %p59 = scmp.eq.s32.totalorder %s26, 1
      %p60 = por %p58, %p59
      %p61 = scmp.ne.s32.totalorder %s52, %s53
      %p62 = scmp.eq.s32.totalorder %s26, 0
      %p63 = por %p61, %p62
      %p64 = scmp.ne.s32.totalorder %s52, %s53
      %p65 = scmp.eq.s32.totalorder %s27, 1
      %p66 = por %p64, %p65
      %p68 = scmp.ne.s32.totalorder %s53, %s67
      %p69 = scmp.eq.s32.totalorder %s27, 0
      %p70 = por %p68, %p69
      %s71 = ssub.s32 %s21, %s28
      %p72 = scmp.eq.s32.totalorder %s71, 0
      %s74 = sadd.s32 %s73, 1
      %s75 = scalar_select %p72, %s73, %s74
      %p78 = pneg %p72
      %p79 = scmp.eq.s32.totalorder %s21, 1
      %p80 = por %p78, %p79
      %p81 = scmp.ne.s32.totalorder %s73, %s76
      %p82 = scmp.eq.s32.totalorder %s21, 0
      %p83 = por %p81, %p82
      %p84 = scmp.ne.s32.totalorder %s73, %s76
      %p85 = scmp.eq.s32.totalorder %s26, 1
      %p86 = por %p84, %p85
      %p87 = scmp.ne.s32.totalorder %s76, %s77
      %p88 = scmp.eq.s32.totalorder %s26, 0
      %p89 = por %p87, %p88
      %p90 = scmp.ne.s32.totalorder %s76, %s77
      %p91 = scmp.eq.s32.totalorder %s27, 1
      %p92 = por %p90, %p91
      %p94 = scmp.ne.s32.totalorder %s77, %s93
      %p95 = scmp.eq.s32.totalorder %s27, 0
      %p96 = por %p94, %p95
      %s97 = ssub.s32 %s21, %s28
      %p98 = scmp.eq.s32.totalorder %s97, 0
      %s100 = sadd.s32 %s99, 1
      %s101 = scalar_select %p98, %s99, %s100
      %p104 = pneg %p98
      %p105 = scmp.eq.s32.totalorder %s21, 1
      %p106 = por %p104, %p105
      %p107 = scmp.ne.s32.totalorder %s99, %s102
      %p108 = scmp.eq.s32.totalorder %s21, 0
      %p109 = por %p107, %p108
      %p110 = scmp.ne.s32.totalorder %s99, %s102
      %p111 = scmp.eq.s32.totalorder %s26, 1
      %p112 = por %p110, %p111
      %p113 = scmp.ne.s32.totalorder %s102, %s103
      %p114 = scmp.eq.s32.totalorder %s26, 0
      %p115 = por %p113, %p114
      %p116 = scmp.ne.s32.totalorder %s102, %s103
      %p117 = scmp.eq.s32.totalorder %s27, 1
      %p118 = por %p116, %p117
      %p120 = scmp.ne.s32.totalorder %s103, %s119
      %p121 = scmp.eq.s32.totalorder %s27, 0
      %p122 = por %p120, %p121
      %s123 = ssub.s32 %s21, %s28
      %p124 = scmp.eq.s32.totalorder %s123, 0
      %s126 = sadd.s32 %s125, 1
      %s127 = scalar_select %p124, %s125, %s126
      %p130 = pneg %p124
      %p131 = scmp.eq.s32.totalorder %s21, 1
      %p132 = por %p130, %p131
      %p133 = scmp.ne.s32.totalorder %s125, %s128
      %p134 = scmp.eq.s32.totalorder %s21, 0
      %p135 = por %p133, %p134
      %p136 = scmp.ne.s32.totalorder %s125, %s128
      %p137 = scmp.eq.s32.totalorder %s26, 1
      %p138 = por %p136, %p137
      %p139 = scmp.ne.s32.totalorder %s128, %s129
      %p140 = scmp.eq.s32.totalorder %s26, 0
      %p141 = por %p139, %p140
      %p142 = scmp.ne.s32.totalorder %s128, %s129
      %p143 = scmp.eq.s32.totalorder %s27, 1
      %p144 = por %p142, %p143
      %p146 = scmp.ne.s32.totalorder %s129, %s145
      %p147 = scmp.eq.s32.totalorder %s27, 0
      %p148 = por %p146, %p147
      %s149 = ssub.s32 %s21, %s28
      %p150 = scmp.eq.s32.totalorder %s149, 0
      %s152 = sadd.s32 %s151, 1
      %s153 = scalar_select %p150, %s151, %s152
      %p156 = pneg %p150
      %p157 = scmp.eq.s32.totalorder %s21, 1
      %p158 = por %p156, %p157
      %p159 = scmp.ne.s32.totalorder %s151, %s154
      %p160 = scmp.eq.s32.totalorder %s21, 0
      %p161 = por %p159, %p160
      %p162 = scmp.ne.s32.totalorder %s151, %s154
      %p163 = scmp.eq.s32.totalorder %s26, 1
      %p164 = por %p162, %p163
      %p165 = scmp.ne.s32.totalorder %s154, %s155
      %p166 = scmp.eq.s32.totalorder %s26, 0
      %p167 = por %p165, %p166
      %p168 = scmp.ne.s32.totalorder %s154, %s155
      %p169 = scmp.eq.s32.totalorder %s27, 1
      %p170 = por %p168, %p169
      %p172 = scmp.ne.s32.totalorder %s155, %s171
      %p173 = scmp.eq.s32.totalorder %s27, 0
      %p174 = por %p172, %p173
      %s175 = ssub.s32 %s21, %s28
      %p176 = scmp.eq.s32.totalorder %s175, 0
      %s178 = sadd.s32 %s177, 1
      %s179 = scalar_select %p176, %s177, %s178
      %p182 = pneg %p176
      %p183 = scmp.eq.s32.totalorder %s21, 1
      %p184 = por %p182, %p183
      %p185 = scmp.ne.s32.totalorder %s177, %s180
      %p186 = scmp.eq.s32.totalorder %s21, 0
      %p187 = por %p185, %p186
      %p188 = scmp.ne.s32.totalorder %s177, %s180
      %p189 = scmp.eq.s32.totalorder %s26, 1
      %p190 = por %p188, %p189
      %p191 = scmp.ne.s32.totalorder %s180, %s181
      %p192 = scmp.eq.s32.totalorder %s26, 0
      %p193 = por %p191, %p192
      %p194 = scmp.ne.s32.totalorder %s180, %s181
      %p195 = scmp.eq.s32.totalorder %s27, 1
      %p196 = por %p194, %p195
      %p198 = scmp.ne.s32.totalorder %s181, %s197
      %p199 = scmp.eq.s32.totalorder %s27, 0
      %p200 = por %p198, %p199
      %s201 = ssub.s32 %s21, %s28
      %p202 = scmp.eq.s32.totalorder %s201, 0
      %s204 = sadd.s32 %s203, 1
      %s205 = scalar_select %p202, %s203, %s204
      %p208 = pneg %p202
      %p209 = scmp.eq.s32.totalorder %s21, 1
      %p210 = por %p208, %p209
      %p211 = scmp.ne.s32.totalorder %s203, %s206
      %p212 = scmp.eq.s32.totalorder %s21, 0
      %p213 = por %p211, %p212
      %p214 = scmp.ne.s32.totalorder %s203, %s206
      %p215 = scmp.eq.s32.totalorder %s26, 1
      %p216 = por %p214, %p215
      %p217 = scmp.ne.s32.totalorder %s206, %s207
      %p218 = scmp.eq.s32.totalorder %s26, 0
      %p219 = por %p217, %p218
      %p220 = scmp.ne.s32.totalorder %s206, %s207
      %p221 = scmp.eq.s32.totalorder %s27, 1
      %p222 = por %p220, %p221
      %p224 = scmp.ne.s32.totalorder %s207, %s223
      %p225 = scmp.eq.s32.totalorder %s27, 0
      %p226 = por %p224, %p225
      %s227 = ssub.s32 %s21, %s28
      %p228 = scmp.eq.s32.totalorder %s227, 0
      %s230 = sadd.s32 %s229, 1
      %s231 = scalar_select %p228, %s229, %s230
      %p234 = pneg %p228
      %p235 = scmp.eq.s32.totalorder %s21, 1
      %p236 = por %p234, %p235
      %p237 = scmp.ne.s32.totalorder %s229, %s232
      %p238 = scmp.eq.s32.totalorder %s21, 0
      %p239 = por %p237, %p238
      %p240 = scmp.ne.s32.totalorder %s229, %s232
      %p241 = scmp.eq.s32.totalorder %s26, 1
      %p242 = por %p240, %p241
      %p243 = scmp.ne.s32.totalorder %s232, %s233
      %p244 = scmp.eq.s32.totalorder %s26, 0
      %p245 = por %p243, %p244
      %p246 = scmp.ne.s32.totalorder %s232, %s233
      %p247 = scmp.eq.s32.totalorder %s27, 1
      %p248 = por %p246, %p247
      %p250 = scmp.ne.s32.totalorder %s233, %s249
      %p251 = scmp.eq.s32.totalorder %s27, 0
      %p252 = por %p250, %p251
      %s253 = ssub.s32 %s21, %s28
      %p254 = scmp.eq.s32.totalorder %s253, 0
      %s256 = sadd.s32 %s255, 1
      %s257 = scalar_select %p254, %s255, %s256
      %p260 = pneg %p254
      %p261 = scmp.eq.s32.totalorder %s21, 1
      %p262 = por %p260, %p261
      %p263 = scmp.ne.s32.totalorder %s255, %s258
      %p264 = scmp.eq.s32.totalorder %s21, 0
      %p265 = por %p263, %p264
      %p266 = scmp.ne.s32.totalorder %s255, %s258
      %p267 = scmp.eq.s32.totalorder %s26, 1
      %p268 = por %p266, %p267
      %p269 = scmp.ne.s32.totalorder %s258, %s259
      %p270 = scmp.eq.s32.totalorder %s26, 0
      %p271 = por %p269, %p270
      %p272 = scmp.ne.s32.totalorder %s258, %s259
      %p273 = scmp.eq.s32.totalorder %s27, 1
      %p274 = por %p272, %p273
      %p276 = scmp.ne.s32.totalorder %s259, %s275
      %p277 = scmp.eq.s32.totalorder %s27, 0
      %p278 = por %p276, %p277
      %s279 = ssub.s32 %s21, %s28
      %p280 = scmp.eq.s32.totalorder %s279, 0
      %s282 = sadd.s32 %s281, 1
      %s283 = scalar_select %p280, %s281, %s282
      %p286 = pneg %p280
      %p287 = scmp.eq.s32.totalorder %s21, 1
      %p288 = por %p286, %p287
      %p289 = scmp.ne.s32.totalorder %s281, %s284
      %p290 = scmp.eq.s32.totalorder %s21, 0
      %p291 = por %p289, %p290
      %p292 = scmp.ne.s32.totalorder %s281, %s284
      %p293 = scmp.eq.s32.totalorder %s26, 1
      %p294 = por %p292, %p293
      %p295 = scmp.ne.s32.totalorder %s284, %s285
      %p296 = scmp.eq.s32.totalorder %s26, 0
      %p297 = por %p295, %p296
      %p298 = scmp.ne.s32.totalorder %s284, %s285
      %p299 = scmp.eq.s32.totalorder %s27, 1
      %p300 = por %p298, %p299
      %p302 = scmp.ne.s32.totalorder %s285, %s301
      %p303 = scmp.eq.s32.totalorder %s27, 0
      %p304 = por %p302, %p303
      %s305 = ssub.s32 %s21, %s28
      %p306 = scmp.eq.s32.totalorder %s305, 0
      %s308 = sadd.s32 %s307, 1
      %s309 = scalar_select %p306, %s307, %s308
      %p312 = pneg %p306
      %p313 = scmp.eq.s32.totalorder %s21, 1
      %p314 = por %p312, %p313
      %p315 = scmp.ne.s32.totalorder %s307, %s310
      %p316 = scmp.eq.s32.totalorder %s21, 0
      %p317 = por %p315, %p316
      %p318 = scmp.ne.s32.totalorder %s307, %s310
      %p319 = scmp.eq.s32.totalorder %s26, 1
      %p320 = por %p318, %p319
      %p321 = scmp.ne.s32.totalorder %s310, %s311
      %p322 = scmp.eq.s32.totalorder %s26, 0
      %p323 = por %p321, %p322
      %p324 = scmp.ne.s32.totalorder %s310, %s311
      %p325 = scmp.eq.s32.totalorder %s27, 1
      %p326 = por %p324, %p325
      %p328 = scmp.ne.s32.totalorder %s311, %s327
      %p329 = scmp.eq.s32.totalorder %s27, 0
      %p330 = por %p328, %p329
      %s331 = ssub.s32 %s21, %s28
      %p332 = scmp.eq.s32.totalorder %s331, 0
      %s334 = sadd.s32 %s333, 1
      %s335 = scalar_select %p332, %s333, %s334
      %p338 = pneg %p332
      %p339 = scmp.eq.s32.totalorder %s21, 1
      %p340 = por %p338, %p339
      %p341 = scmp.ne.s32.totalorder %s333, %s336
      %p342 = scmp.eq.s32.totalorder %s21, 0
      %p343 = por %p341, %p342
      %p344 = scmp.ne.s32.totalorder %s333, %s336
      %p345 = scmp.eq.s32.totalorder %s26, 1
      %p346 = por %p344, %p345
      %p347 = scmp.ne.s32.totalorder %s336, %s337
      %p348 = scmp.eq.s32.totalorder %s26, 0
      %p349 = por %p347, %p348
      %p350 = scmp.ne.s32.totalorder %s336, %s337
      %p351 = scmp.eq.s32.totalorder %s27, 1
      %p352 = por %p350, %p351
      %p354 = scmp.ne.s32.totalorder %s337, %s353
      %p355 = scmp.eq.s32.totalorder %s27, 0
      %p356 = por %p354, %p355
      %s357 = ssub.s32 %s21, %s28
      %p358 = scmp.eq.s32.totalorder %s357, 0
      %s360 = sadd.s32 %s359, 1
      %s361 = scalar_select %p358, %s359, %s360
      %p364 = pneg %p358
      %p365 = scmp.eq.s32.totalorder %s21, 1
      %p366 = por %p364, %p365
      %p367 = scmp.ne.s32.totalorder %s359, %s362
      %p368 = scmp.eq.s32.totalorder %s21, 0
      %p369 = por %p367, %p368
      %p370 = scmp.ne.s32.totalorder %s359, %s362
      %p371 = scmp.eq.s32.totalorder %s26, 1
      %p372 = por %p370, %p371
      %p373 = scmp.ne.s32.totalorder %s362, %s363
      %p374 = scmp.eq.s32.totalorder %s26, 0
      %p375 = por %p373, %p374
      %p376 = scmp.ne.s32.totalorder %s362, %s363
      %p377 = scmp.eq.s32.totalorder %s27, 1
      %p378 = por %p376, %p377
      %p380 = scmp.ne.s32.totalorder %s363, %s379
      %p381 = scmp.eq.s32.totalorder %s27, 0
      %p382 = por %p380, %p381
      %s384 = sadd.s32 %s383, 1
      %p387 = scmp.eq.s32.totalorder %s21, 1
      %p388 = scmp.ne.s32.totalorder %s383, %s385
      %p389 = scmp.eq.s32.totalorder %s21, 0
      %p390 = por %p388, %p389
      %p391 = scmp.ne.s32.totalorder %s383, %s385
      %p392 = scmp.eq.s32.totalorder %s26, 1
      %p393 = por %p391, %p392
      %p394 = scmp.ne.s32.totalorder %s385, %s386
      %p395 = scmp.eq.s32.totalorder %s26, 0
      %p396 = por %p394, %p395
      %p397 = scmp.ne.s32.totalorder %s385, %s386
      %p398 = scmp.eq.s32.totalorder %s27, 1
      %p399 = por %p397, %p398
      %p401 = scmp.ne.s32.totalorder %s386, %s400
      %p402 = scmp.eq.s32.totalorder %s27, 0
      %p403 = por %p401, %p402
      %p404 = scmp.le.s32.totalorder 1, %s21
      %p405 = scmp.lt.s32.totalorder %s21, 3
      %p406 = pnand %p404, %p405
      %p407 = pneg %p406
      // Predicated region
      $region9: #{tpu_custom_call.1} parent=5 // pred_check
        _
      $region10: #{tpu_custom_call.1} parent=5 // pred_check_branch
        %409 = sbr.rel (%p406) target = $region12
      $region11: #{tpu_custom_call.1} parent=5 // pred_region
        %s410 = ssub.s32 %s21, 1
        // Predicated region
        $region13: #{tpu_custom_call.1} parent=11 // pred_check
          %p411 = pneg %p42
        $region14: #{tpu_custom_call.1} parent=11 // pred_check_branch
          %413 = sbr.rel (%p411) target = $region16
        $region15: #{tpu_custom_call.1} parent=11 // pred_region
          _
        $region16: #{tpu_custom_call.1} parent=11 // pred_fallthru
          _
        // Predicated region
        $region17: #{tpu_custom_call.1} parent=11 // pred_check
          %p414 = pneg %p63
        $region18: #{tpu_custom_call.1} parent=11 // pred_check_branch
          %416 = sbr.rel (%p414) target = $region20
        $region19: #{tpu_custom_call.1} parent=11 // pred_region
          _
        $region20: #{tpu_custom_call.1} parent=11 // pred_fallthru
          _
      $region12: #{tpu_custom_call.1} parent=5 // pred_fallthru
        _
      %p417 = scmp.lt.s32.totalorder %s21, 2
      // Predicated region
      $region21: #{tpu_custom_call.1} parent=5 // pred_check
        %p418 = pneg %p417
      $region22: #{tpu_custom_call.1} parent=5 // pred_check_branch
        %420 = sbr.rel (%p418) target = $region24
      $region23: #{tpu_custom_call.1} parent=5 // pred_region
        // Predicated region
        $region25: #{tpu_custom_call.1} parent=23 // pred_check
          %p421 = pneg %p83
        $region26: #{tpu_custom_call.1} parent=23 // pred_check_branch
          %423 = sbr.rel (%p421) target = $region28
        $region27: #{tpu_custom_call.1} parent=23 // pred_region
          %p424 = scmp.lt.s32.totalorder %s21, 1
          %s425 = scalar_select %p424, %s21, 1
          %s426 = smul.addr %s425, 8
          %s427 = smul.addr %s426, 8
          %s428 = scalar_lea.vmem %s2, %s427
        $region28: #{tpu_custom_call.1} parent=23 // pred_fallthru
          _
        // Predicated region
        $region29: #{tpu_custom_call.1} parent=23 // pred_check
          %p429 = pneg %p109
        $region30: #{tpu_custom_call.1} parent=23 // pred_check_branch
          %431 = sbr.rel (%p429) target = $region32
        $region31: #{tpu_custom_call.1} parent=23 // pred_region
          %p432 = scmp.lt.s32.totalorder %s21, 1
          %s433 = scalar_select %p432, %s21, 1
          %s434 = smul.addr %s433, 2
          %s435 = scalar_lea.vmem %s3, %s434
        $region32: #{tpu_custom_call.1} parent=23 // pred_fallthru
          _
        // Predicated region
        $region33: #{tpu_custom_call.1} parent=23 // pred_check
          %p436 = pneg %p135
        $region34: #{tpu_custom_call.1} parent=23 // pred_check_branch
          %438 = sbr.rel (%p436) target = $region36
        $region35: #{tpu_custom_call.1} parent=23 // pred_region
          %p439 = scmp.lt.s32.totalorder %s21, 1
          %s440 = scalar_select %p439, %s21, 1
          %s441 = smul.addr %s440, 8
          %s442 = smul.addr %s441, 8
          %s443 = scalar_lea.vmem %s4, %s442
        $region36: #{tpu_custom_call.1} parent=23 // pred_fallthru
          _
        // Predicated region
        $region37: #{tpu_custom_call.1} parent=23 // pred_check
          %p444 = pneg %p161
        $region38: #{tpu_custom_call.1} parent=23 // pred_check_branch
          %446 = sbr.rel (%p444) target = $region40
        $region39: #{tpu_custom_call.1} parent=23 // pred_region
          %p447 = scmp.lt.s32.totalorder %s21, 1
          %s448 = scalar_select %p447, %s21, 1
          %s449 = scalar_lea.vmem %s5, %s448
        $region40: #{tpu_custom_call.1} parent=23 // pred_fallthru
          _
        // Predicated region
        $region41: #{tpu_custom_call.1} parent=23 // pred_check
          %p450 = pneg %p187
        $region42: #{tpu_custom_call.1} parent=23 // pred_check_branch
          %452 = sbr.rel (%p450) target = $region44
        $region43: #{tpu_custom_call.1} parent=23 // pred_region
          %p453 = scmp.lt.s32.totalorder %s21, 1
          %s454 = scalar_select %p453, %s21, 1
          %s455 = scalar_lea.vmem %s6, %s454
        $region44: #{tpu_custom_call.1} parent=23 // pred_fallthru
          _
        // Predicated region
        $region45: #{tpu_custom_call.1} parent=23 // pred_check
          %p456 = pneg %p213
        $region46: #{tpu_custom_call.1} parent=23 // pred_check_branch
          %458 = sbr.rel (%p456) target = $region48
        $region47: #{tpu_custom_call.1} parent=23 // pred_region
          %p459 = scmp.lt.s32.totalorder %s21, 1
          %s460 = scalar_select %p459, %s21, 1
          %s461 = scalar_lea.vmem %s7, %s460
        $region48: #{tpu_custom_call.1} parent=23 // pred_fallthru
          _
        // Predicated region
        $region49: #{tpu_custom_call.1} parent=23 // pred_check
          %p462 = pneg %p239
        $region50: #{tpu_custom_call.1} parent=23 // pred_check_branch
          %464 = sbr.rel (%p462) target = $region52
        $region51: #{tpu_custom_call.1} parent=23 // pred_region
          %p465 = scmp.lt.s32.totalorder %s21, 1
          %s466 = scalar_select %p465, %s21, 1
          %s467 = smul.addr %s466, 4
          %s468 = smul.addr %s467, 8
          %s469 = scalar_lea.vmem %s8, %s468
        $region52: #{tpu_custom_call.1} parent=23 // pred_fallthru
          _
        // Predicated region
        $region53: #{tpu_custom_call.1} parent=23 // pred_check
          %p470 = pneg %p265
        $region54: #{tpu_custom_call.1} parent=23 // pred_check_branch
          %472 = sbr.rel (%p470) target = $region56
        $region55: #{tpu_custom_call.1} parent=23 // pred_region
          %p473 = scmp.lt.s32.totalorder %s21, 1
          %s474 = scalar_select %p473, %s21, 1
          %s475 = scalar_lea.vmem %s9, %s474
        $region56: #{tpu_custom_call.1} parent=23 // pred_fallthru
          _
        // Predicated region
        $region57: #{tpu_custom_call.1} parent=23 // pred_check
          %p476 = pneg %p291
        $region58: #{tpu_custom_call.1} parent=23 // pred_check_branch
          %478 = sbr.rel (%p476) target = $region60
        $region59: #{tpu_custom_call.1} parent=23 // pred_region
          %p479 = scmp.lt.s32.totalorder %s21, 1
          %s480 = scalar_select %p479, %s21, 1
          %s481 = smul.addr %s480, 8
          %s482 = smul.addr %s481, 8
          %s483 = scalar_lea.vmem %s10, %s482
        $region60: #{tpu_custom_call.1} parent=23 // pred_fallthru
          _
        // Predicated region
        $region61: #{tpu_custom_call.1} parent=23 // pred_check
          %p484 = pneg %p317
        $region62: #{tpu_custom_call.1} parent=23 // pred_check_branch
          %486 = sbr.rel (%p484) target = $region64
        $region63: #{tpu_custom_call.1} parent=23 // pred_region
          %p487 = scmp.lt.s32.totalorder %s21, 1
          %s488 = scalar_select %p487, %s21, 1
          %s489 = scalar_lea.vmem %s11, %s488
        $region64: #{tpu_custom_call.1} parent=23 // pred_fallthru
          _
        // Predicated region
        $region65: #{tpu_custom_call.1} parent=23 // pred_check
          %p490 = pneg %p343
        $region66: #{tpu_custom_call.1} parent=23 // pred_check_branch
          %492 = sbr.rel (%p490) target = $region68
        $region67: #{tpu_custom_call.1} parent=23 // pred_region
          %p493 = scmp.lt.s32.totalorder %s21, 1
          %s494 = scalar_select %p493, %s21, 1
          %s495 = scalar_lea.vmem %s12, %s494
        $region68: #{tpu_custom_call.1} parent=23 // pred_fallthru
          _
        // Predicated region
        $region69: #{tpu_custom_call.1} parent=23 // pred_check
          %p496 = pneg %p369
        $region70: #{tpu_custom_call.1} parent=23 // pred_check_branch
          %498 = sbr.rel (%p496) target = $region72
        $region71: #{tpu_custom_call.1} parent=23 // pred_region
          %p499 = scmp.lt.s32.totalorder %s21, 1
          %s500 = scalar_select %p499, %s21, 1
          %s501 = scalar_lea.vmem %s13, %s500
        $region72: #{tpu_custom_call.1} parent=23 // pred_fallthru
          _
      $region24: #{tpu_custom_call.1} parent=5 // pred_fallthru
        _
      %p502 = scmp.le.s32.totalorder 1, %s21
      %p503 = scmp.lt.s32.totalorder %s21, 3
      %p504 = pnand %p502, %p503
      %p505 = pneg %p504
      // Predicated region
      $region73: #{tpu_custom_call.1} parent=5 // pred_check
        _
      $region74: #{tpu_custom_call.1} parent=5 // pred_check_branch
        %507 = sbr.rel (%p504) target = $region76
      $region75: #{tpu_custom_call.1} parent=5 // pred_region
        %s508 = ssub.s32 %s21, 1
        %p509 = pneg %p42
        %p510 = pneg %p39
        %p511 = pneg %p63
        %p512 = pneg %p60
        %p513 = scmp.lt.s32.totalorder %s26, 1
        %s514 = scalar_select %p513, %s26, 1
        %s515 = smul.addr %s514, 8
        %s516 = smul.addr %s515, 8
        %s517 = scalar_lea.vmem %s2, %s516
        %p518 = pneg %p89
        %p519 = pneg %p86
        %p520 = scmp.lt.s32.totalorder %s26, 1
        %s521 = scalar_select %p520, %s26, 1
        %s522 = smul.addr %s521, 2
        %s523 = scalar_lea.vmem %s3, %s522
        %p524 = pneg %p115
        %p525 = pneg %p112
        %p526 = scmp.lt.s32.totalorder %s26, 1
        %s527 = scalar_select %p526, %s26, 1
        %s528 = smul.addr %s527, 8
        %s529 = smul.addr %s528, 8
        %s530 = scalar_lea.vmem %s4, %s529
        %p531 = pneg %p141
        %p532 = pneg %p138
        %p533 = scmp.lt.s32.totalorder %s26, 1
        %s534 = scalar_select %p533, %s26, 1
        %s535 = scalar_lea.vmem %s5, %s534
        %p536 = pneg %p167
        %p537 = pneg %p164
        %p538 = scmp.lt.s32.totalorder %s26, 1
        %s539 = scalar_select %p538, %s26, 1
        %s540 = scalar_lea.vmem %s6, %s539
        %p541 = pneg %p193
        %p542 = pneg %p190
        %p543 = scmp.lt.s32.totalorder %s26, 1
        %s544 = scalar_select %p543, %s26, 1
        %s545 = scalar_lea.vmem %s7, %s544
        %p546 = pneg %p219
        %p547 = pneg %p216
        %p548 = scmp.lt.s32.totalorder %s26, 1
        %s549 = scalar_select %p548, %s26, 1
        %s550 = smul.addr %s549, 4
        %s551 = smul.addr %s550, 8
        %s552 = scalar_lea.vmem %s8, %s551
        %p553 = pneg %p245
        %p554 = pneg %p242
        %p555 = scmp.lt.s32.totalorder %s26, 1
        %s556 = scalar_select %p555, %s26, 1
        %s557 = scalar_lea.vmem %s9, %s556
        %p558 = pneg %p271
        %p559 = pneg %p268
        %p560 = scmp.lt.s32.totalorder %s26, 1
        %s561 = scalar_select %p560, %s26, 1
        %s562 = smul.addr %s561, 8
        %s563 = smul.addr %s562, 8
        %s564 = scalar_lea.vmem %s10, %s563
        %p565 = pneg %p297
        %p566 = pneg %p294
        %p567 = scmp.lt.s32.totalorder %s26, 1
        %s568 = scalar_select %p567, %s26, 1
        %s569 = scalar_lea.vmem %s11, %s568
        %p570 = pneg %p323
        %p571 = pneg %p320
        %p572 = scmp.lt.s32.totalorder %s26, 1
        %s573 = scalar_select %p572, %s26, 1
        %s574 = scalar_lea.vmem %s12, %s573
        %p575 = pneg %p349
        %p576 = pneg %p346
        %p577 = scmp.lt.s32.totalorder %s26, 1
        %s578 = scalar_select %p577, %s26, 1
        %s579 = scalar_lea.vmem %s13, %s578
        %p580 = pneg %p375
        %p581 = pneg %p372
        %p582 = pneg %p396
        %p583 = pneg %p393
        %p584 = scmp.lt.s32.totalorder %s26, 1
        %s585 = scalar_select %p584, %s26, 1
        %s586 = smul.addr %s585, 8
        %s587 = smul.addr %s586, 8
        %s588 = scalar_lea.vmem %s2, %s587
        %p589 = scmp.lt.s32.totalorder %s26, 1
        %s590 = scalar_select %p589, %s26, 1
        %s591 = smul.addr %s590, 2
        %s592 = scalar_lea.vmem %s3, %s591
        %p593 = scmp.lt.s32.totalorder %s26, 1
        %s594 = scalar_select %p593, %s26, 1
        %s595 = smul.addr %s594, 8
        %s596 = smul.addr %s595, 8
        %s597 = scalar_lea.vmem %s4, %s596
        %p598 = scmp.lt.s32.totalorder %s26, 1
        %s599 = scalar_select %p598, %s26, 1
        %s600 = scalar_lea.vmem %s5, %s599
        %p601 = scmp.lt.s32.totalorder %s26, 1
        %s602 = scalar_select %p601, %s26, 1
        %s603 = scalar_lea.vmem %s6, %s602
        %p604 = scmp.lt.s32.totalorder %s26, 1
        %s605 = scalar_select %p604, %s26, 1
        %s606 = scalar_lea.vmem %s7, %s605
        %p607 = scmp.lt.s32.totalorder %s26, 1
        %s608 = scalar_select %p607, %s26, 1
        %s609 = smul.addr %s608, 4
        %s610 = smul.addr %s609, 8
        %s611 = scalar_lea.vmem %s8, %s610
        %p612 = scmp.lt.s32.totalorder %s26, 1
        %s613 = scalar_select %p612, %s26, 1
        %s614 = scalar_lea.vmem %s9, %s613
        %p615 = scmp.lt.s32.totalorder %s26, 1
        %s616 = scalar_select %p615, %s26, 1
        %s617 = smul.addr %s616, 8
        %s618 = smul.addr %s617, 8
        %s619 = scalar_lea.vmem %s10, %s618
        %p620 = scmp.lt.s32.totalorder %s26, 1
        %s621 = scalar_select %p620, %s26, 1
        %s622 = scalar_lea.vmem %s11, %s621
        %p623 = scmp.lt.s32.totalorder %s26, 1
        %s624 = scalar_select %p623, %s26, 1
        %s625 = scalar_lea.vmem %s12, %s624
        %p626 = scmp.lt.s32.totalorder %s26, 1
        %s627 = scalar_select %p626, %s26, 1
        %s628 = scalar_lea.vmem %s13, %s627
        %p629 = scmp.eq.s32.totalorder %s26, 0
        // Predicated region
        $region77: #{tpu_custom_call.1} parent=75 // pred_check
          %p630 = pneg %p629
        $region78: #{tpu_custom_call.1} parent=75 // pred_check_branch
          %632 = sbr.rel (%p630) target = $region80
        $region79: #{tpu_custom_call.1} parent=75 // pred_region
          %v633 = vld [vmem:[%s0] sm:$0xff]
          %v634 = vld [vmem:[%s0 + $0x8] sm:$0xff]
          %vm635 = vcmask 261120
          %636 = vst.msk [vmem:[#allocation2] sm:$0xff] %vm635, %v633
          %637 = vst.msk [vmem:[#allocation2 + $0x8] sm:$0xff] %vm635, %v634
        $region80: #{tpu_custom_call.1} parent=75 // pred_fallthru
          _
        %v638 = vld [vmem:[#allocation2] sm:$0xff]
        %v639 = vld [vmem:[#allocation2 + $0x8] sm:$0xff]
        %v640 = vld [vmem:[%s588] sm:$0xff]
        %v641 = vld [vmem:[%s588 + $0x8] sm:$0xff]
        %v642 = vld [vmem:[%s588 + $0x10] sm:$0xff]
        %v643 = vld [vmem:[%s588 + $0x18] sm:$0xff]
        %v644 = vld [vmem:[%s588 + $0x20] sm:$0xff]
        %v645 = vld [vmem:[%s588 + $0x28] sm:$0xff]
        %v646 = vld [vmem:[%s588 + $0x30] sm:$0xff]
        %v647 = vld [vmem:[%s588 + $0x38] sm:$0xff]
        %v648 = vld [vmem:[%s592] sm:$0x3]
        %v650 = vperm.slane %v648, 0
        %v651 = vperm.slane %v648, 1
        %vm654 = vcmask 261120
        %v656 = vsel %vm654, %v638, 0
        %v659 = vsel %vm654, %v639, 0
        %661 = vmatpush.msra.mxu0 0.0
        %662 = vmatpush.msra.mxu0 0.0
        %663 = vmatpush.msra.mxu0 0.0
        %664 = vmatpush.msra.mxu0 0.0
        %665 = vmatpush.msra.mxu0 0.0
        %666 = vmatpush.msra.mxu0 0.0
        %667 = vmatpush.msra.mxu0 0.0
        %668 = vmatpush.msra.mxu0 0.0
        %669 = vmatpush.msra.mxu0 0.0
        %670 = vmatpush.msra.mxu0 0.0
        %671 = vmatpush.msra.mxu0 0.0
        %672 = vmatpush.msra.mxu0 0.0
        %673 = vmatpush.msra.mxu0 %v646
        %674 = vmatpush.msra.mxu0 %v644
        %675 = vmatpush.msra.mxu0 %v642
        %676 = vmatpush.msra.mxu0 %v640
        %677 = vmatmul.f32.gmra.mxu0 %v656
        %v678 = vpop.f32.mrf.mxu0
        %v679 = vadd.f32 %v650, %v678
        %680 = vmatmul.f32.gmra.mxu0 %v659
        %v681 = vpop.f32.mrf.mxu0
        %v682 = vadd.f32 %v650, %v681
        %683 = vdwg.mxu0
        %684 = vmatpush.msra.mxu0 0.0
        %685 = vmatpush.msra.mxu0 0.0
        %686 = vmatpush.msra.mxu0 0.0
        %687 = vmatpush.msra.mxu0 0.0
        %688 = vmatpush.msra.mxu0 0.0
        %689 = vmatpush.msra.mxu0 0.0
        %690 = vmatpush.msra.mxu0 0.0
        %691 = vmatpush.msra.mxu0 0.0
        %692 = vmatpush.msra.mxu0 0.0
        %693 = vmatpush.msra.mxu0 0.0
        %694 = vmatpush.msra.mxu0 0.0
        %695 = vmatpush.msra.mxu0 0.0
        %696 = vmatpush.msra.mxu0 %v647
        %697 = vmatpush.msra.mxu0 %v645
        %698 = vmatpush.msra.mxu0 %v643
        %699 = vmatpush.msra.mxu0 %v641
        %700 = vmatmul.f32.gmra.mxu0 %v656
        %v701 = vpop.f32.mrf.mxu0
        %v702 = vadd.f32 %v651, %v701
        %703 = vmatmul.f32.gmra.mxu0 %v659
        %v704 = vpop.f32.mrf.mxu0
        %v705 = vadd.f32 %v651, %v704
        %706 = vdwg.mxu0
        %v707 = vld [vmem:[%s1] sm:$0x1]
        %v708 = vld [vmem:[%s1 + $0x1] sm:$0x1]
        %710 = vrot.lane.b32.xlu0 %v679, 64
        %v711 = vpop.permute.xlu0 %710
        %vm712 = vcmask 130048
        %v713 = vsel %vm712, %v679, 0
        %v715 = vsel %vm712, %v711, 0
        %717 = vmatpush.xpose.msra.mxu0 0.0
        %718 = vmatpush.xpose.msra.mxu0 0.0
        %719 = vmatpush.xpose.msra.mxu0 0.0
        %720 = vmatpush.xpose.msra.mxu0 0.0
        %721 = vmatpush.xpose.msra.mxu0 0.0
        %722 = vmatpush.xpose.msra.mxu0 0.0
        %723 = vmatpush.xpose.msra.mxu0 0.0
        %724 = vmatpush.xpose.msra.mxu0 0.0
        %725 = vmatpush.xpose.msra.mxu0 0.0
        %726 = vmatpush.xpose.msra.mxu0 0.0
        %727 = vmatpush.xpose.msra.mxu0 0.0
        %728 = vmatpush.xpose.msra.mxu0 0.0
        %729 = vmatpush.xpose.msra.mxu0 0.0
        %730 = vmatpush.xpose.msra.mxu0 0.0
        %731 = vmatpush.xpose.msra.mxu0 0.0
        %732 = vmatpush.xpose.msra.mxu0 %v715
        %733 = vmatmul.f32.gmra.mxu0 %v713
        %v734 = vpop.f32.mrf.mxu0
        %v735 = vadd.f32 0.0, %v734
        %736 = vdwg.mxu0
        %738 = vrot.lane.b32.xlu0 %v682, 64
        %v739 = vpop.permute.xlu0 %738
        %v740 = vsel %vm712, %v682, 0
        %v742 = vsel %vm712, %v739, 0
        %744 = vmatpush.xpose.msra.mxu0 0.0
        %745 = vmatpush.xpose.msra.mxu0 0.0
        %746 = vmatpush.xpose.msra.mxu0 0.0
        %747 = vmatpush.xpose.msra.mxu0 0.0
        %748 = vmatpush.xpose.msra.mxu0 0.0
        %749 = vmatpush.xpose.msra.mxu0 0.0
        %750 = vmatpush.xpose.msra.mxu0 0.0
        %751 = vmatpush.xpose.msra.mxu0 0.0
        %752 = vmatpush.xpose.msra.mxu0 0.0
        %753 = vmatpush.xpose.msra.mxu0 0.0
        %754 = vmatpush.xpose.msra.mxu0 0.0
        %755 = vmatpush.xpose.msra.mxu0 0.0
        %756 = vmatpush.xpose.msra.mxu0 0.0
        %757 = vmatpush.xpose.msra.mxu0 0.0
        %758 = vmatpush.xpose.msra.mxu0 0.0
        %759 = vmatpush.xpose.msra.mxu0 %v742
        %760 = vmatmul.f32.gmra.mxu0 %v740
        %v761 = vpop.f32.mrf.mxu0
        %v762 = vadd.f32 0.0, %v761
        %763 = vdwg.mxu0
        %v764 = vmul.f32 %v735, 0.25
        %v765 = vmul.f32 %v762, 0.25
        %v768 = vperm.slane %v707, 0
        %v769 = vperm.slane %v708, 0
        %v772 = vadd.f32 %v764, %v768
        %v773 = vadd.f32 %v765, %v769
        %vm774 = vcmask 64512
        %v775 = vsel %vm774, %v772, -inf
        %776 = vmax.xlane.f32.xlu0 %v775
        %v777 = vpop.xlane.xlu0 %776
        %v778 = vsel %vm774, %v773, -inf
        %779 = vmax.xlane.f32.xlu0 %v778
        %v780 = vpop.xlane.xlu0 %779
        %v781 = vsub.f32 %v772, %v777
        %v782 = vsub.f32 %v773, %v780
        %v783 = vmul.f32 %v781, 1.442695
        %v784 = vpow.pop %v783
        %v785 = vmul.f32 %v782, 1.442695
        %v786 = vpow.pop %v785
        %v787 = vsel %vm774, %v784, 0.0
        %788 = vadd.xlane.f32.xlu0 %v787
        %v789 = vpop.xlane.xlu0 %788
        %v790 = vsel %vm774, %v786, 0.0
        %791 = vadd.xlane.f32.xlu0 %v790
        %v792 = vpop.xlane.xlu0 %791
        %v793 = vrcp.pop %v789
        %v794 = vrcp.pop %v792
        %v795 = vmul.f32 %v784, %v793
        %v796 = vmul.f32 %v786, %v794
        %v798 = vsel %vm774, %v795, 0
        %800 = vmatpush.msra.mxu0 0.0
        %801 = vmatpush.msra.mxu0 0.0
        %802 = vmatpush.msra.mxu0 0.0
        %803 = vmatpush.msra.mxu0 0.0
        %804 = vmatpush.msra.mxu0 0.0
        %805 = vmatpush.msra.mxu0 0.0
        %806 = vmatpush.msra.mxu0 0.0
        %807 = vmatpush.msra.mxu0 0.0
        %808 = vmatpush.msra.mxu0 0.0
        %809 = vmatpush.msra.mxu0 0.0
        %810 = vmatpush.msra.mxu0 0.0
        %811 = vmatpush.msra.mxu0 0.0
        %812 = vmatpush.msra.mxu0 0.0
        %813 = vmatpush.msra.mxu0 0.0
        %814 = vmatpush.msra.mxu0 0.0
        %815 = vmatpush.msra.mxu0 %v702
        %816 = vmatmul.f32.gmra.mxu0 %v798
        %v817 = vpop.f32.mrf.mxu0
        %v818 = vadd.f32 0.0, %v817
        %819 = vdwg.mxu0
        %v821 = vsel %vm774, %v796, 0
        %823 = vmatpush.msra.mxu0 0.0
        %824 = vmatpush.msra.mxu0 0.0
        %825 = vmatpush.msra.mxu0 0.0
        %826 = vmatpush.msra.mxu0 0.0
        %827 = vmatpush.msra.mxu0 0.0
        %828 = vmatpush.msra.mxu0 0.0
        %829 = vmatpush.msra.mxu0 0.0
        %830 = vmatpush.msra.mxu0 0.0
        %831 = vmatpush.msra.mxu0 0.0
        %832 = vmatpush.msra.mxu0 0.0
        %833 = vmatpush.msra.mxu0 0.0
        %834 = vmatpush.msra.mxu0 0.0
        %835 = vmatpush.msra.mxu0 0.0
        %836 = vmatpush.msra.mxu0 0.0
        %837 = vmatpush.msra.mxu0 0.0
        %838 = vmatpush.msra.mxu0 %v705
        %839 = vmatmul.f32.gmra.mxu0 %v821
        %v840 = vpop.f32.mrf.mxu0
        %v841 = vadd.f32 0.0, %v840
        %842 = vdwg.mxu0
        %843 = vrot.lane.b32.xlu0 %v679, 112
        %v844 = vpop.permute.xlu0 %843
        %845 = vrot.lane.b32.xlu0 %v679, 48
        %v846 = vpop.permute.xlu0 %845
        %v847 = vsel %vm712, %v844, 0
        %v849 = vsel %vm712, %v846, 0
        %851 = vmatpush.xpose.msra.mxu0 0.0
        %852 = vmatpush.xpose.msra.mxu0 0.0
        %853 = vmatpush.xpose.msra.mxu0 0.0
        %854 = vmatpush.xpose.msra.mxu0 0.0
        %855 = vmatpush.xpose.msra.mxu0 0.0
        %856 = vmatpush.xpose.msra.mxu0 0.0
        %857 = vmatpush.xpose.msra.mxu0 0.0
        %858 = vmatpush.xpose.msra.mxu0 0.0
        %859 = vmatpush.xpose.msra.mxu0 0.0
        %860 = vmatpush.xpose.msra.mxu0 0.0
        %861 = vmatpush.xpose.msra.mxu0 0.0
        %862 = vmatpush.xpose.msra.mxu0 0.0
        %863 = vmatpush.xpose.msra.mxu0 0.0
        %864 = vmatpush.xpose.msra.mxu0 0.0
        %865 = vmatpush.xpose.msra.mxu0 0.0
        %866 = vmatpush.xpose.msra.mxu0 %v849
        %867 = vmatmul.f32.gmra.mxu0 %v847
        %v868 = vpop.f32.mrf.mxu0
        %v869 = vadd.f32 0.0, %v868
        %870 = vdwg.mxu0
        %871 = vrot.lane.b32.xlu0 %v682, 112
        %v872 = vpop.permute.xlu0 %871
        %873 = vrot.lane.b32.xlu0 %v682, 48
        %v874 = vpop.permute.xlu0 %873
        %v875 = vsel %vm712, %v872, 0
        %v877 = vsel %vm712, %v874, 0
        %879 = vmatpush.xpose.msra.mxu0 0.0
        %880 = vmatpush.xpose.msra.mxu0 0.0
        %881 = vmatpush.xpose.msra.mxu0 0.0
        %882 = vmatpush.xpose.msra.mxu0 0.0
        %883 = vmatpush.xpose.msra.mxu0 0.0
        %884 = vmatpush.xpose.msra.mxu0 0.0
        %885 = vmatpush.xpose.msra.mxu0 0.0
        %886 = vmatpush.xpose.msra.mxu0 0.0
        %887 = vmatpush.xpose.msra.mxu0 0.0
        %888 = vmatpush.xpose.msra.mxu0 0.0
        %889 = vmatpush.xpose.msra.mxu0 0.0
        %890 = vmatpush.xpose.msra.mxu0 0.0
        %891 = vmatpush.xpose.msra.mxu0 0.0
        %892 = vmatpush.xpose.msra.mxu0 0.0
        %893 = vmatpush.xpose.msra.mxu0 0.0
        %894 = vmatpush.xpose.msra.mxu0 %v877
        %895 = vmatmul.f32.gmra.mxu0 %v875
        %v896 = vpop.f32.mrf.mxu0
        %v897 = vadd.f32 0.0, %v896
        %898 = vdwg.mxu0
        %v899 = vmul.f32 %v869, 0.25
        %v900 = vmul.f32 %v897, 0.25
        %v901 = vadd.f32 %v899, %v768
        %v902 = vadd.f32 %v900, %v769
        %v903 = vsel %vm774, %v901, -inf
        %904 = vmax.xlane.f32.xlu0 %v903
        %v905 = vpop.xlane.xlu0 %904
        %v906 = vsel %vm774, %v902, -inf
        %907 = vmax.xlane.f32.xlu0 %v906
        %v908 = vpop.xlane.xlu0 %907
        %v909 = vsub.f32 %v901, %v905
        %v910 = vsub.f32 %v902, %v908
        %v911 = vmul.f32 %v909, 1.442695
        %v912 = vpow.pop %v911
        %v913 = vmul.f32 %v910, 1.442695
        %v914 = vpow.pop %v913
        %v915 = vsel %vm774, %v912, 0.0
        %916 = vadd.xlane.f32.xlu0 %v915
        %v917 = vpop.xlane.xlu0 %916
        %v918 = vsel %vm774, %v914, 0.0
        %919 = vadd.xlane.f32.xlu0 %v918
        %v920 = vpop.xlane.xlu0 %919
        %v921 = vrcp.pop %v917
        %v922 = vrcp.pop %v920
        %v923 = vmul.f32 %v912, %v921
        %v924 = vmul.f32 %v914, %v922
        %926 = vrot.lane.b32.xlu0 %v702, 112
        %v927 = vpop.permute.xlu0 %926
        %v930 = vsel %vm774, %v923, 0
        %932 = vmatpush.msra.mxu0 0.0
        %933 = vmatpush.msra.mxu0 0.0
        %934 = vmatpush.msra.mxu0 0.0
        %935 = vmatpush.msra.mxu0 0.0
        %936 = vmatpush.msra.mxu0 0.0
        %937 = vmatpush.msra.mxu0 0.0
        %938 = vmatpush.msra.mxu0 0.0
        %939 = vmatpush.msra.mxu0 0.0
        %940 = vmatpush.msra.mxu0 0.0
        %941 = vmatpush.msra.mxu0 0.0
        %942 = vmatpush.msra.mxu0 0.0
        %943 = vmatpush.msra.mxu0 0.0
        %944 = vmatpush.msra.mxu0 0.0
        %945 = vmatpush.msra.mxu0 0.0
        %946 = vmatpush.msra.mxu0 0.0
        %947 = vmatpush.msra.mxu0 %v927
        %948 = vmatmul.f32.gmra.mxu0 %v930
        %v949 = vpop.f32.mrf.mxu0
        %v950 = vadd.f32 0.0, %v949
        %951 = vdwg.mxu0
        %953 = vrot.lane.b32.xlu0 %v705, 112
        %v954 = vpop.permute.xlu0 %953
        %v957 = vsel %vm774, %v924, 0
        %959 = vmatpush.msra.mxu0 0.0
        %960 = vmatpush.msra.mxu0 0.0
        %961 = vmatpush.msra.mxu0 0.0
        %962 = vmatpush.msra.mxu0 0.0
        %963 = vmatpush.msra.mxu0 0.0
        %964 = vmatpush.msra.mxu0 0.0
        %965 = vmatpush.msra.mxu0 0.0
        %966 = vmatpush.msra.mxu0 0.0
        %967 = vmatpush.msra.mxu0 0.0
        %968 = vmatpush.msra.mxu0 0.0
        %969 = vmatpush.msra.mxu0 0.0
        %970 = vmatpush.msra.mxu0 0.0
        %971 = vmatpush.msra.mxu0 0.0
        %972 = vmatpush.msra.mxu0 0.0
        %973 = vmatpush.msra.mxu0 0.0
        %974 = vmatpush.msra.mxu0 %v954
        %975 = vmatmul.f32.gmra.mxu0 %v957
        %v976 = vpop.f32.mrf.mxu0
        %v977 = vadd.f32 0.0, %v976
        %978 = vdwg.mxu0
        %979 = vrot.lane.b32.xlu0 %v679, 96
        %v980 = vpop.permute.xlu0 %979
        %981 = vrot.lane.b32.xlu0 %v679, 32
        %v982 = vpop.permute.xlu0 %981
        %v983 = vsel %vm712, %v980, 0
        %v985 = vsel %vm712, %v982, 0
        %987 = vmatpush.xpose.msra.mxu0 0.0
        %988 = vmatpush.xpose.msra.mxu0 0.0
        %989 = vmatpush.xpose.msra.mxu0 0.0
        %990 = vmatpush.xpose.msra.mxu0 0.0
        %991 = vmatpush.xpose.msra.mxu0 0.0
        %992 = vmatpush.xpose.msra.mxu0 0.0
        %993 = vmatpush.xpose.msra.mxu0 0.0
        %994 = vmatpush.xpose.msra.mxu0 0.0
        %995 = vmatpush.xpose.msra.mxu0 0.0
        %996 = vmatpush.xpose.msra.mxu0 0.0
        %997 = vmatpush.xpose.msra.mxu0 0.0
        %998 = vmatpush.xpose.msra.mxu0 0.0
        %999 = vmatpush.xpose.msra.mxu0 0.0
        %1000 = vmatpush.xpose.msra.mxu0 0.0
        %1001 = vmatpush.xpose.msra.mxu0 0.0
        %1002 = vmatpush.xpose.msra.mxu0 %v985
        %1003 = vmatmul.f32.gmra.mxu0 %v983
        %v1004 = vpop.f32.mrf.mxu0
        %v1005 = vadd.f32 0.0, %v1004
        %1006 = vdwg.mxu0
        %1007 = vrot.lane.b32.xlu0 %v682, 96
        %v1008 = vpop.permute.xlu0 %1007
        %1009 = vrot.lane.b32.xlu0 %v682, 32
        %v1010 = vpop.permute.xlu0 %1009
        %v1011 = vsel %vm712, %v1008, 0
        %v1013 = vsel %vm712, %v1010, 0
        %1015 = vmatpush.xpose.msra.mxu0 0.0
        %1016 = vmatpush.xpose.msra.mxu0 0.0
        %1017 = vmatpush.xpose.msra.mxu0 0.0
        %1018 = vmatpush.xpose.msra.mxu0 0.0
        %1019 = vmatpush.xpose.msra.mxu0 0.0
        %1020 = vmatpush.xpose.msra.mxu0 0.0
        %1021 = vmatpush.xpose.msra.mxu0 0.0
        %1022 = vmatpush.xpose.msra.mxu0 0.0
        %1023 = vmatpush.xpose.msra.mxu0 0.0
        %1024 = vmatpush.xpose.msra.mxu0 0.0
        %1025 = vmatpush.xpose.msra.mxu0 0.0
        %1026 = vmatpush.xpose.msra.mxu0 0.0
        %1027 = vmatpush.xpose.msra.mxu0 0.0
        %1028 = vmatpush.xpose.msra.mxu0 0.0
        %1029 = vmatpush.xpose.msra.mxu0 0.0
        %1030 = vmatpush.xpose.msra.mxu0 %v1013
        %1031 = vmatmul.f32.gmra.mxu0 %v1011
        %v1032 = vpop.f32.mrf.mxu0
        %v1033 = vadd.f32 0.0, %v1032
        %1034 = vdwg.mxu0
        %v1035 = vmul.f32 %v1005, 0.25
        %v1036 = vmul.f32 %v1033, 0.25
        %v1037 = vadd.f32 %v1035, %v768
        %v1038 = vadd.f32 %v1036, %v769
        %v1039 = vsel %vm774, %v1037, -inf
        %1040 = vmax.xlane.f32.xlu0 %v1039
        %v1041 = vpop.xlane.xlu0 %1040
        %v1042 = vsel %vm774, %v1038, -inf
        %1043 = vmax.xlane.f32.xlu0 %v1042
        %v1044 = vpop.xlane.xlu0 %1043
        %v1045 = vsub.f32 %v1037, %v1041
        %v1046 = vsub.f32 %v1038, %v1044
        %v1047 = vmul.f32 %v1045, 1.442695
        %v1048 = vpow.pop %v1047
        %v1049 = vmul.f32 %v1046, 1.442695
        %v1050 = vpow.pop %v1049
        %v1051 = vsel %vm774, %v1048, 0.0
        %1052 = vadd.xlane.f32.xlu0 %v1051
        %v1053 = vpop.xlane.xlu0 %1052
        %v1054 = vsel %vm774, %v1050, 0.0
        %1055 = vadd.xlane.f32.xlu0 %v1054
        %v1056 = vpop.xlane.xlu0 %1055
        %v1057 = vrcp.pop %v1053
        %v1058 = vrcp.pop %v1056
        %v1059 = vmul.f32 %v1048, %v1057
        %v1060 = vmul.f32 %v1050, %v1058
        %1061 = vrot.lane.b32.xlu0 %v702, 96
        %v1062 = vpop.permute.xlu0 %1061
        %v1065 = vsel %vm774, %v1059, 0
        %1067 = vmatpush.msra.mxu0 0.0
        %1068 = vmatpush.msra.mxu0 0.0
        %1069 = vmatpush.msra.mxu0 0.0
        %1070 = vmatpush.msra.mxu0 0.0
        %1071 = vmatpush.msra.mxu0 0.0
        %1072 = vmatpush.msra.mxu0 0.0
        %1073 = vmatpush.msra.mxu0 0.0
        %1074 = vmatpush.msra.mxu0 0.0
        %1075 = vmatpush.msra.mxu0 0.0
        %1076 = vmatpush.msra.mxu0 0.0
        %1077 = vmatpush.msra.mxu0 0.0
        %1078 = vmatpush.msra.mxu0 0.0
        %1079 = vmatpush.msra.mxu0 0.0
        %1080 = vmatpush.msra.mxu0 0.0
        %1081 = vmatpush.msra.mxu0 0.0
        %1082 = vmatpush.msra.mxu0 %v1062
        %1083 = vmatmul.f32.gmra.mxu0 %v1065
        %v1084 = vpop.f32.mrf.mxu0
        %v1085 = vadd.f32 0.0, %v1084
        %1086 = vdwg.mxu0
        %1087 = vrot.lane.b32.xlu0 %v705, 96
        %v1088 = vpop.permute.xlu0 %1087
        %v1091 = vsel %vm774, %v1060, 0
        %1093 = vmatpush.msra.mxu0 0.0
        %1094 = vmatpush.msra.mxu0 0.0
        %1095 = vmatpush.msra.mxu0 0.0
        %1096 = vmatpush.msra.mxu0 0.0
        %1097 = vmatpush.msra.mxu0 0.0
        %1098 = vmatpush.msra.mxu0 0.0
        %1099 = vmatpush.msra.mxu0 0.0
        %1100 = vmatpush.msra.mxu0 0.0
        %1101 = vmatpush.msra.mxu0 0.0
        %1102 = vmatpush.msra.mxu0 0.0
        %1103 = vmatpush.msra.mxu0 0.0
        %1104 = vmatpush.msra.mxu0 0.0
        %1105 = vmatpush.msra.mxu0 0.0
        %1106 = vmatpush.msra.mxu0 0.0
        %1107 = vmatpush.msra.mxu0 0.0
        %1108 = vmatpush.msra.mxu0 %v1088
        %1109 = vmatmul.f32.gmra.mxu0 %v1091
        %v1110 = vpop.f32.mrf.mxu0
        %v1111 = vadd.f32 0.0, %v1110
        %1112 = vdwg.mxu0
        %1113 = vrot.lane.b32.xlu0 %v679, 80
        %v1114 = vpop.permute.xlu0 %1113
        %1115 = vrot.lane.b32.xlu0 %v679, 16
        %v1116 = vpop.permute.xlu0 %1115
        %v1117 = vsel %vm712, %v1114, 0
        %v1119 = vsel %vm712, %v1116, 0
        %1121 = vmatpush.xpose.msra.mxu0 0.0
        %1122 = vmatpush.xpose.msra.mxu0 0.0
        %1123 = vmatpush.xpose.msra.mxu0 0.0
        %1124 = vmatpush.xpose.msra.mxu0 0.0
        %1125 = vmatpush.xpose.msra.mxu0 0.0
        %1126 = vmatpush.xpose.msra.mxu0 0.0
        %1127 = vmatpush.xpose.msra.mxu0 0.0
        %1128 = vmatpush.xpose.msra.mxu0 0.0
        %1129 = vmatpush.xpose.msra.mxu0 0.0
        %1130 = vmatpush.xpose.msra.mxu0 0.0
        %1131 = vmatpush.xpose.msra.mxu0 0.0
        %1132 = vmatpush.xpose.msra.mxu0 0.0
        %1133 = vmatpush.xpose.msra.mxu0 0.0
        %1134 = vmatpush.xpose.msra.mxu0 0.0
        %1135 = vmatpush.xpose.msra.mxu0 0.0
        %1136 = vmatpush.xpose.msra.mxu0 %v1119
        %1137 = vmatmul.f32.gmra.mxu0 %v1117
        %v1138 = vpop.f32.mrf.mxu0
        %v1139 = vadd.f32 0.0, %v1138
        %1140 = vdwg.mxu0
        %1141 = vrot.lane.b32.xlu0 %v682, 80
        %v1142 = vpop.permute.xlu0 %1141
        %1143 = vrot.lane.b32.xlu0 %v682, 16
        %v1144 = vpop.permute.xlu0 %1143
        %v1145 = vsel %vm712, %v1142, 0
        %v1147 = vsel %vm712, %v1144, 0
        %1149 = vmatpush.xpose.msra.mxu0 0.0
        %1150 = vmatpush.xpose.msra.mxu0 0.0
        %1151 = vmatpush.xpose.msra.mxu0 0.0
        %1152 = vmatpush.xpose.msra.mxu0 0.0
        %1153 = vmatpush.xpose.msra.mxu0 0.0
        %1154 = vmatpush.xpose.msra.mxu0 0.0
        %1155 = vmatpush.xpose.msra.mxu0 0.0
        %1156 = vmatpush.xpose.msra.mxu0 0.0
        %1157 = vmatpush.xpose.msra.mxu0 0.0
        %1158 = vmatpush.xpose.msra.mxu0 0.0
        %1159 = vmatpush.xpose.msra.mxu0 0.0
        %1160 = vmatpush.xpose.msra.mxu0 0.0
        %1161 = vmatpush.xpose.msra.mxu0 0.0
        %1162 = vmatpush.xpose.msra.mxu0 0.0
        %1163 = vmatpush.xpose.msra.mxu0 0.0
        %1164 = vmatpush.xpose.msra.mxu0 %v1147
        %1165 = vmatmul.f32.gmra.mxu0 %v1145
        %v1166 = vpop.f32.mrf.mxu0
        %v1167 = vadd.f32 0.0, %v1166
        %1168 = vdwg.mxu0
        %v1169 = vmul.f32 %v1139, 0.25
        %v1170 = vmul.f32 %v1167, 0.25
        %v1171 = vadd.f32 %v1169, %v768
        %v1172 = vadd.f32 %v1170, %v769
        %v1173 = vsel %vm774, %v1171, -inf
        %1174 = vmax.xlane.f32.xlu0 %v1173
        %v1175 = vpop.xlane.xlu0 %1174
        %v1176 = vsel %vm774, %v1172, -inf
        %1177 = vmax.xlane.f32.xlu0 %v1176
        %v1178 = vpop.xlane.xlu0 %1177
        %v1179 = vsub.f32 %v1171, %v1175
        %v1180 = vsub.f32 %v1172, %v1178
        %v1181 = vmul.f32 %v1179, 1.442695
        %v1182 = vpow.pop %v1181
        %v1183 = vmul.f32 %v1180, 1.442695
        %v1184 = vpow.pop %v1183
        %v1185 = vsel %vm774, %v1182, 0.0
        %1186 = vadd.xlane.f32.xlu0 %v1185
        %v1187 = vpop.xlane.xlu0 %1186
        %v1188 = vsel %vm774, %v1184, 0.0
        %1189 = vadd.xlane.f32.xlu0 %v1188
        %v1190 = vpop.xlane.xlu0 %1189
        %v1191 = vrcp.pop %v1187
        %v1192 = vrcp.pop %v1190
        %v1193 = vmul.f32 %v1182, %v1191
        %v1194 = vmul.f32 %v1184, %v1192
        %1195 = vrot.lane.b32.xlu0 %v702, 80
        %v1196 = vpop.permute.xlu0 %1195
        %v1199 = vsel %vm774, %v1193, 0
        %1201 = vmatpush.msra.mxu0 0.0
        %1202 = vmatpush.msra.mxu0 0.0
        %1203 = vmatpush.msra.mxu0 0.0
        %1204 = vmatpush.msra.mxu0 0.0
        %1205 = vmatpush.msra.mxu0 0.0
        %1206 = vmatpush.msra.mxu0 0.0
        %1207 = vmatpush.msra.mxu0 0.0
        %1208 = vmatpush.msra.mxu0 0.0
        %1209 = vmatpush.msra.mxu0 0.0
        %1210 = vmatpush.msra.mxu0 0.0
        %1211 = vmatpush.msra.mxu0 0.0
        %1212 = vmatpush.msra.mxu0 0.0
        %1213 = vmatpush.msra.mxu0 0.0
        %1214 = vmatpush.msra.mxu0 0.0
        %1215 = vmatpush.msra.mxu0 0.0
        %1216 = vmatpush.msra.mxu0 %v1196
        %1217 = vmatmul.f32.gmra.mxu0 %v1199
        %v1218 = vpop.f32.mrf.mxu0
        %v1219 = vadd.f32 0.0, %v1218
        %1220 = vdwg.mxu0
        %1221 = vrot.lane.b32.xlu0 %v705, 80
        %v1222 = vpop.permute.xlu0 %1221
        %v1225 = vsel %vm774, %v1194, 0
        %1227 = vmatpush.msra.mxu0 0.0
        %1228 = vmatpush.msra.mxu0 0.0
        %1229 = vmatpush.msra.mxu0 0.0
        %1230 = vmatpush.msra.mxu0 0.0
        %1231 = vmatpush.msra.mxu0 0.0
        %1232 = vmatpush.msra.mxu0 0.0
        %1233 = vmatpush.msra.mxu0 0.0
        %1234 = vmatpush.msra.mxu0 0.0
        %1235 = vmatpush.msra.mxu0 0.0
        %1236 = vmatpush.msra.mxu0 0.0
        %1237 = vmatpush.msra.mxu0 0.0
        %1238 = vmatpush.msra.mxu0 0.0
        %1239 = vmatpush.msra.mxu0 0.0
        %1240 = vmatpush.msra.mxu0 0.0
        %1241 = vmatpush.msra.mxu0 0.0
        %1242 = vmatpush.msra.mxu0 %v1222
        %1243 = vmatmul.f32.gmra.mxu0 %v1225
        %v1244 = vpop.f32.mrf.mxu0
        %v1245 = vadd.f32 0.0, %v1244
        %1246 = vdwg.mxu0
        %1249 = vrot.lane.b32.xlu0 %v950, 16
        %v1250 = vpop.permute.xlu0 %1249
        %1251 = vrot.lane.b32.xlu0 %v977, 16
        %v1252 = vpop.permute.xlu0 %1251
        %1257 = vrot.lane.b32.xlu0 %v1085, 32
        %v1258 = vpop.permute.xlu0 %1257
        %1259 = vrot.lane.b32.xlu0 %v1111, 32
        %v1260 = vpop.permute.xlu0 %1259
        %1265 = vrot.lane.b32.xlu0 %v1219, 48
        %v1266 = vpop.permute.xlu0 %1265
        %1267 = vrot.lane.b32.xlu0 %v1245, 48
        %v1268 = vpop.permute.xlu0 %1267
        %v1271 = vsel %vm712, %v818, %v1250
        %v1272 = vsel %vm712, %v841, %v1252
        %v1273 = vsel %vm654, %v1271, %v1258
        %v1274 = vsel %vm654, %v1272, %v1260
        %vm1275 = vcmask 392192
        %v1276 = vsel %vm1275, %v1273, %v1266
        %v1277 = vsel %vm1275, %v1274, %v1268
        %v1278 = vld [vmem:[%s597] sm:$0xff]
        %v1279 = vld [vmem:[%s597 + $0x8] sm:$0xff]
        %v1280 = vld [vmem:[%s597 + $0x10] sm:$0xff]
        %v1281 = vld [vmem:[%s597 + $0x18] sm:$0xff]
        %v1282 = vld [vmem:[%s597 + $0x20] sm:$0xff]
        %v1283 = vld [vmem:[%s597 + $0x28] sm:$0xff]
        %v1284 = vld [vmem:[%s597 + $0x30] sm:$0xff]
        %v1285 = vld [vmem:[%s597 + $0x38] sm:$0xff]
        %v1286 = vld [vmem:[%s600] sm:$0x1]
        %v1288 = vperm.slane %v1286, 0
        %vm1290 = vcmask 523264
        %v1292 = vsel %vm1290, %v1276, 0
        %v1295 = vsel %vm1290, %v1277, 0
        %1297 = vmatpush.msra.mxu0 0.0
        %1298 = vmatpush.msra.mxu0 0.0
        %1299 = vmatpush.msra.mxu0 0.0
        %1300 = vmatpush.msra.mxu0 0.0
        %1301 = vmatpush.msra.mxu0 0.0
        %1302 = vmatpush.msra.mxu0 0.0
        %1303 = vmatpush.msra.mxu0 0.0
        %1304 = vmatpush.msra.mxu0 0.0
        %1305 = vmatpush.msra.mxu0 %v1285
        %1306 = vmatpush.msra.mxu0 %v1284
        %1307 = vmatpush.msra.mxu0 %v1283
        %1308 = vmatpush.msra.mxu0 %v1282
        %1309 = vmatpush.msra.mxu0 %v1281
        %1310 = vmatpush.msra.mxu0 %v1280
        %1311 = vmatpush.msra.mxu0 %v1279
        %1312 = vmatpush.msra.mxu0 %v1278
        %1313 = vmatmul.f32.gmra.mxu0 %v1292
        %v1314 = vpop.f32.mrf.mxu0
        %v1315 = vadd.f32 %v1288, %v1314
        %1316 = vmatmul.f32.gmra.mxu0 %v1295
        %v1317 = vpop.f32.mrf.mxu0
        %v1318 = vadd.f32 %v1288, %v1317
        %1319 = vdwg.mxu0
        %v1320 = vadd.f32 %v638, %v1315
        %v1321 = vadd.f32 %v639, %v1318
        %v1322 = vld [vmem:[%s603] sm:$0x1]
        %v1323 = vld [vmem:[%s606] sm:$0x1]
        %v1324 = vsel %vm654, %v1320, 0.0
        %1325 = vadd.xlane.f32.xlu0 %v1324
        %v1326 = vpop.xlane.xlu0 %1325
        %v1327 = vsel %vm654, %v1321, 0.0
        %1328 = vadd.xlane.f32.xlu0 %v1327
        %v1329 = vpop.xlane.xlu0 %1328
        %v1330 = vrcp.pop 32.0
        %v1331 = vmul.f32 32.0, %v1330
        %v1332 = vsub.f32 1.0, %v1331
        %v1333 = vmul.f32 %v1330, %v1332
        %v1334 = vadd.f32 %v1330, %v1333
        %vm1335 = vweird.f32 %v1330
        %v1336 = vsel %vm1335, %v1330, %v1334
        %v1337 = vmul.f32 %v1326, %v1336
        %v1338 = vmul.f32 %v1329, %v1336
        %v1339 = vsub.f32 %v1320, %v1337
        %v1340 = vsub.f32 %v1321, %v1338
        %v1341 = vmul.f32 %v1339, %v1339
        %v1342 = vmul.f32 %v1340, %v1340
        %v1343 = vsel %vm654, %v1341, 0.0
        %1344 = vadd.xlane.f32.xlu0 %v1343
        %v1345 = vpop.xlane.xlu0 %1344
        %v1346 = vsel %vm654, %v1342, 0.0
        %1347 = vadd.xlane.f32.xlu0 %v1346
        %v1348 = vpop.xlane.xlu0 %1347
        %v1349 = vmul.f32 %v1345, %v1336
        %v1350 = vmul.f32 %v1348, %v1336
        %v1351 = vadd.f32 %v1349, 1e-05
        %v1352 = vadd.f32 %v1350, 1e-05
        %v1353 = vrsqrt.pop %v1351
        %v1354 = vmul.f32 %v1353, %v1351
        %v1355 = vmul.f32 %v1354, %v1353
        %v1356 = vmul.f32 0.5, %v1355
        %v1357 = vsub.f32 1.5, %v1356
        %v1358 = vmul.f32 %v1353, %v1357
        %vm1359 = vweird.f32 %v1351
        %vm1360 = vweird.f32 %v1353
        %vm1361 = vmor %vm1359, %vm1360
        %v1362 = vsel %vm1361, %v1353, %v1358
        %v1363 = vrsqrt.pop %v1352
        %v1364 = vmul.f32 %v1363, %v1352
        %v1365 = vmul.f32 %v1364, %v1363
        %v1366 = vmul.f32 0.5, %v1365
        %v1367 = vsub.f32 1.5, %v1366
        %v1368 = vmul.f32 %v1363, %v1367
        %vm1369 = vweird.f32 %v1352
        %vm1370 = vweird.f32 %v1363
        %vm1371 = vmor %vm1369, %vm1370
        %v1372 = vsel %vm1371, %v1363, %v1368
        %v1373 = vmul.f32 %v1339, %v1362
        %v1374 = vmul.f32 %v1340, %v1372
        %v1376 = vperm.slane %v1322, 0
        %v1378 = vmul.f32 %v1373, %v1376
        %v1379 = vmul.f32 %v1374, %v1376
        %v1381 = vperm.slane %v1323, 0
        %v1383 = vadd.f32 %v1378, %v1381
        %v1384 = vadd.f32 %v1379, %v1381
        %v1385 = vld [vmem:[%s611] sm:$0xff]
        %v1386 = vld [vmem:[%s611 + $0x8] sm:$0xff]
        %v1387 = vld [vmem:[%s611 + $0x10] sm:$0xff]
        %v1388 = vld [vmem:[%s611 + $0x18] sm:$0xff]
        %v1389 = vld [vmem:[%s614] sm:$0x1]
        %v1391 = vperm.slane %v1389, 0
        %v1394 = vsel %vm654, %v1383, 0
        %v1397 = vsel %vm654, %v1384, 0
        %1399 = vmatpush.msra.mxu0 0.0
        %1400 = vmatpush.msra.mxu0 0.0
        %1401 = vmatpush.msra.mxu0 0.0
        %1402 = vmatpush.msra.mxu0 0.0
        %1403 = vmatpush.msra.mxu0 0.0
        %1404 = vmatpush.msra.mxu0 0.0
        %1405 = vmatpush.msra.mxu0 0.0
        %1406 = vmatpush.msra.mxu0 0.0
        %1407 = vmatpush.msra.mxu0 0.0
        %1408 = vmatpush.msra.mxu0 0.0
        %1409 = vmatpush.msra.mxu0 0.0
        %1410 = vmatpush.msra.mxu0 0.0
        %1411 = vmatpush.msra.mxu0 %v1388
        %1412 = vmatpush.msra.mxu0 %v1387
        %1413 = vmatpush.msra.mxu0 %v1386
        %1414 = vmatpush.msra.mxu0 %v1385
        %1415 = vmatmul.f32.gmra.mxu0 %v1394
        %v1416 = vpop.f32.mrf.mxu0
        %v1417 = vadd.f32 %v1391, %v1416
        %1418 = vmatmul.f32.gmra.mxu0 %v1397
        %v1419 = vpop.f32.mrf.mxu0
        %v1420 = vadd.f32 %v1391, %v1419
        %1421 = vdwg.mxu0
        %v1422 = vmax.f32 %v1417, 0.0
        %v1423 = vmax.f32 %v1420, 0.0
        %v1424 = vld [vmem:[%s619] sm:$0xff]
        %v1425 = vld [vmem:[%s619 + $0x8] sm:$0xff]
        %v1426 = vld [vmem:[%s619 + $0x10] sm:$0xff]
        %v1427 = vld [vmem:[%s619 + $0x18] sm:$0xff]
        %v1428 = vld [vmem:[%s619 + $0x20] sm:$0xff]
        %v1429 = vld [vmem:[%s619 + $0x28] sm:$0xff]
        %v1430 = vld [vmem:[%s619 + $0x30] sm:$0xff]
        %v1431 = vld [vmem:[%s619 + $0x38] sm:$0xff]
        %v1432 = vld [vmem:[%s622] sm:$0x1]
        %v1434 = vperm.slane %v1432, 0
        %v1437 = vsel %vm1290, %v1422, 0
        %v1440 = vsel %vm1290, %v1423, 0
        %1442 = vmatpush.msra.mxu0 0.0
        %1443 = vmatpush.msra.mxu0 0.0
        %1444 = vmatpush.msra.mxu0 0.0
        %1445 = vmatpush.msra.mxu0 0.0
        %1446 = vmatpush.msra.mxu0 0.0
        %1447 = vmatpush.msra.mxu0 0.0
        %1448 = vmatpush.msra.mxu0 0.0
        %1449 = vmatpush.msra.mxu0 0.0
        %1450 = vmatpush.msra.mxu0 %v1431
        %1451 = vmatpush.msra.mxu0 %v1430
        %1452 = vmatpush.msra.mxu0 %v1429
        %1453 = vmatpush.msra.mxu0 %v1428
        %1454 = vmatpush.msra.mxu0 %v1427
        %1455 = vmatpush.msra.mxu0 %v1426
        %1456 = vmatpush.msra.mxu0 %v1425
        %1457 = vmatpush.msra.mxu0 %v1424
        %1458 = vmatmul.f32.gmra.mxu0 %v1437
        %v1459 = vpop.f32.mrf.mxu0
        %v1460 = vadd.f32 %v1434, %v1459
        %1461 = vmatmul.f32.gmra.mxu0 %v1440
        %v1462 = vpop.f32.mrf.mxu0
        %v1463 = vadd.f32 %v1434, %v1462
        %1464 = vdwg.mxu0
        %v1465 = vadd.f32 %v1383, %v1460
        %v1466 = vadd.f32 %v1384, %v1463
        %v1467 = vld [vmem:[%s625] sm:$0x1]
        %v1468 = vld [vmem:[%s628] sm:$0x1]
        %v1469 = vsel %vm654, %v1465, 0.0
        %1470 = vadd.xlane.f32.xlu0 %v1469
        %v1471 = vpop.xlane.xlu0 %1470
        %v1472 = vsel %vm654, %v1466, 0.0
        %1473 = vadd.xlane.f32.xlu0 %v1472
        %v1474 = vpop.xlane.xlu0 %1473
        %v1475 = vmul.f32 %v1471, %v1336
        %v1476 = vmul.f32 %v1474, %v1336
        %v1477 = vsub.f32 %v1465, %v1475
        %v1478 = vsub.f32 %v1466, %v1476
        %v1479 = vmul.f32 %v1477, %v1477
        %v1480 = vmul.f32 %v1478, %v1478
        %v1481 = vsel %vm654, %v1479, 0.0
        %1482 = vadd.xlane.f32.xlu0 %v1481
        %v1483 = vpop.xlane.xlu0 %1482
        %v1484 = vsel %vm654, %v1480, 0.0
        %1485 = vadd.xlane.f32.xlu0 %v1484
        %v1486 = vpop.xlane.xlu0 %1485
        %v1487 = vmul.f32 %v1483, %v1336
        %v1488 = vmul.f32 %v1486, %v1336
        %v1489 = vadd.f32 %v1487, 1e-05
        %v1490 = vadd.f32 %v1488, 1e-05
        %v1491 = vrsqrt.pop %v1489
        %v1492 = vmul.f32 %v1491, %v1489
        %v1493 = vmul.f32 %v1492, %v1491
        %v1494 = vmul.f32 0.5, %v1493
        %v1495 = vsub.f32 1.5, %v1494
        %v1496 = vmul.f32 %v1491, %v1495
        %vm1497 = vweird.f32 %v1489
        %vm1498 = vweird.f32 %v1491
        %vm1499 = vmor %vm1497, %vm1498
        %v1500 = vsel %vm1499, %v1491, %v1496
        %v1501 = vrsqrt.pop %v1490
        %v1502 = vmul.f32 %v1501, %v1490
        %v1503 = vmul.f32 %v1502, %v1501
        %v1504 = vmul.f32 0.5, %v1503
        %v1505 = vsub.f32 1.5, %v1504
        %v1506 = vmul.f32 %v1501, %v1505
        %vm1507 = vweird.f32 %v1490
        %vm1508 = vweird.f32 %v1501
        %vm1509 = vmor %vm1507, %vm1508
        %v1510 = vsel %vm1509, %v1501, %v1506
        %v1511 = vmul.f32 %v1477, %v1500
        %v1512 = vmul.f32 %v1478, %v1510
        %v1514 = vperm.slane %v1467, 0
        %v1516 = vmul.f32 %v1511, %v1514
        %v1517 = vmul.f32 %v1512, %v1514
        %v1519 = vperm.slane %v1468, 0
        %v1521 = vadd.f32 %v1516, %v1519
        %v1522 = vadd.f32 %v1517, %v1519
        %1523 = vst.msk [vmem:[#allocation2] sm:$0xff] %vm654, %v1521
        %1524 = vst.msk [vmem:[#allocation2 + $0x8] sm:$0xff] %vm654, %v1522
        // Predicated region
        $region81: #{tpu_custom_call.1} parent=75 // pred_check
          %p1525 = pneg %p393
        $region82: #{tpu_custom_call.1} parent=75 // pred_check_branch
          %1527 = sbr.rel (%p1525) target = $region84
        $region83: #{tpu_custom_call.1} parent=75 // pred_region
          %1529 = vsyncadd [#allocation3], 0
          %s1530 = sshll.u32 [#allocation2], 4
          %s1531 = int_to_ptr.vmem [resolvable:$true] %s1530
          %s1532 = sshll.u32 %s14, 4
          %s1533 = int_to_ptr.hbm [resolvable:$true] %s1532
          %1538 = dma.vmem_to_hbm [thread:$0]  %s1531, 256, %s1533, [#allocation3], 128, 128, 8
        $region84: #{tpu_custom_call.1} parent=75 // pred_fallthru
          _
        // Predicated region
        $region85: #{tpu_custom_call.1} parent=75 // pred_check
          %p1539 = pneg %p393
        $region86: #{tpu_custom_call.1} parent=75 // pred_check_branch
          %1541 = sbr.rel (%p1539) target = $region88
        $region87: #{tpu_custom_call.1} parent=75 // pred_region
          %1543 = dma.done [#allocation3], 256
        $region88: #{tpu_custom_call.1} parent=75 // pred_fallthru
          _
      $region76: #{tpu_custom_call.1} parent=5 // pred_fallthru
        _
      %p1544 = scmp.le.s32.totalorder 2, %s21
      // Predicated region
      $region89: #{tpu_custom_call.1} parent=5 // pred_check
        %p1545 = pneg %p1544
      $region90: #{tpu_custom_call.1} parent=5 // pred_check_branch
        %1547 = sbr.rel (%p1545) target = $region92
      $region91: #{tpu_custom_call.1} parent=5 // pred_region
        %s1548 = ssub.s32 %s21, 2
      $region92: #{tpu_custom_call.1} parent=5 // pred_fallthru
        _
    $region6: #{tpu_custom_call.1} parent=1 // loop_footer
      %s25 = sadd.s32 1, %s21
    $region7: #{tpu_custom_call.1} parent=1 // loop_footer_branch
      %20 = sbr.rel target = $region3
    $region8: #{tpu_custom_call.1} parent=1 // loop_exit
      _
    %1549 = vsyncpa [#allocation3], 1
    %s1550 = scalar_lea.sflag [#allocation3], 1
    %1551 = vsyncpa %s1550, 1

</llo_original>
